<compile_context>
chip_gen: v7x
topology: tpu7x:2x2x1
jax: 0.10.0
libtpu: 0.0.40
codegen_flags: <defaults>
</compile_context>

<pallas_src>
import functools

import jax
import jax.numpy as jnp
from jax import lax
from jax.experimental import pallas as pl
from jax.experimental.pallas import tpu as pltpu

BN_EPS = 1e-5


def _im2col_patch(x_ref, row0, *, TH, Wo, KH, KW, Cin, stride):
    """Build the (TM, KH*KW*Cin) bf16 patch for this row tile from the resident
    padded NHWC image (shifted in-VMEM windows; no HBM im2col materialization)."""
    taps = []
    for k in range(KH * KW):
        kh, kw = divmod(k, KW)
        if stride == 1:
            win = x_ref[0, pl.ds(row0 + kh, TH), kw:kw + Wo, :]
        else:
            win = x_ref[0, pl.ds(row0 + kh, TH, stride), pl.ds(kw, Wo, stride), :]
        taps.append(win.reshape(TH * Wo, Cin))            # (TM, Cin), Cin on lanes
    return taps[0] if len(taps) == 1 else jnp.concatenate(taps, axis=-1)


def _stats_kernel(x_ref, w_ref, stats_ref, *, TH, Wo, KH, KW, Cin, stride):
    """Pass 1 (batch_norm only): per-tile per-channel [sum, sum_sq] of the conv."""
    rt = pl.program_id(1)
    row0 = pl.multiple_of(rt * (TH * stride), TH * stride)
    patch = _im2col_patch(x_ref, row0, TH=TH, Wo=Wo, KH=KH, KW=KW, Cin=Cin,
                          stride=stride)
    # (TM, K) @ (K, Cout) -> (TM, Cout): sublane reductions give lane-dense (1, Cout).
    acc = jnp.dot(patch, w_ref[...], preferred_element_type=jnp.float32)
    s = jnp.sum(acc, axis=0, keepdims=True)               # (1, Cout)
    ss = jnp.sum(acc * acc, axis=0, keepdims=True)        # (1, Cout)
    stats_ref[0, 0] = jnp.concatenate([s, ss], axis=0)    # single (2, Cout) store


def _conv_apply_kernel(x_ref, w_ref, scale_ref, shift_ref, o_ref, *,
                       TH, Wo, KH, KW, Cin, stride, relu):
    """Pass 2: conv tile emitted directly as (Cout, TM) + fused scale/shift (+ReLU)."""
    rt = pl.program_id(1)
    row0 = pl.multiple_of(rt * (TH * stride), TH * stride)
    patch = _im2col_patch(x_ref, row0, TH=TH, Wo=Wo, KH=KH, KW=KW, Cin=Cin,
                          stride=stride)
    # (K, Cout) x (TM, K), contracting (0, 1) -> (Cout, TM): no f32 output transpose.
    y = lax.dot_general(w_ref[...], patch, (((0,), (1,)), ((), ())),
                        preferred_element_type=jnp.float32)
    y = y * scale_ref[...] + shift_ref[...]               # f32 epilogue, (Cout,1) bcast
    if relu:
        y = jnp.maximum(y, 0.0)
    o_ref[0] = y.astype(o_ref.dtype)


def _pick_row_tile(Ho, Wo, target_lanes=2048):
    """Largest TH dividing Ho whose TH*Wo tile is 128-aligned (prefer 256-aligned)
    and not much larger than ~target_lanes; full image is the always-legal fallback."""
    cands = [th for th in range(1, Ho + 1)
             if Ho % th == 0 and ((th * Wo) % 128 == 0 or th == Ho)]
    pool = [th for th in cands if th * Wo <= max(target_lanes, Wo)] or [min(cands)]
    aligned = [th for th in pool if (th * Wo) % 256 == 0]
    return max(aligned) if aligned else max(pool)


def _vmem_limit_bytes():
    """~75% of physical VMEM, capped at 96 MiB (v5e/v6e: 128 MiB phys -> 96 MiB;
    v7x: 64 MiB phys -> 48 MiB), never below the 32 MiB scoped default."""
    try:
        cap = int(pltpu.get_tpu_info().vmem_capacity_bytes)
    except Exception:
        cap = 64 * 1024 * 1024
    return max(32 * 1024 * 1024, min(cap * 3 // 4, 96 * 1024 * 1024))


def conv_block_forward(x_nchw, weight, bias, gamma, beta, *,
                       stride, padding, relu=True, batch_norm=True,
                       compute_dtype=jnp.bfloat16, row_tile=None):
    """Forward pass of ConvBlock.

    x_nchw : (N, Cin, H, W) f32   weight : (Cout, Cin, KH, KW)   bias/gamma/beta : (Cout,)
    returns: (N, Cout, Ho, Wo) f32
    """
    N, Cin, H, W = x_nchw.shape
    Cout, _, KH, KW = weight.shape
    Ho = (H + 2 * padding - KH) // stride + 1
    Wo = (W + 2 * padding - KW) // stride + 1
    Hp, Wp = H + 2 * padding, W + 2 * padding

    TH = row_tile if row_tile is not None else _pick_row_tile(Ho, Wo)
    assert Ho % TH == 0, (Ho, TH)
    assert (TH * Wo) % 128 == 0 or TH == Ho, (
        "row_tile must give a 128-aligned output tile (or the full image)", TH, Wo)
    n_rt = Ho // TH
    TM = TH * Wo
    M = N * Ho * Wo

    # Layout glue: NCHW -> padded NHWC bf16 (single fused transpose+pad+cast; the
    # transpose is required to put Cin on lanes for the MXU contraction).
    x_nhwc = jnp.transpose(x_nchw, (0, 2, 3, 1))
    xp = jnp.pad(x_nhwc, ((0, 0), (padding, padding), (padding, padding), (0, 0)))
    xp = xp.astype(compute_dtype)
    # weight (Cout, Cin, KH, KW) -> (KH*KW*Cin, Cout): deep-K operand matching the
    # (kh, kw, cin) lane order of the in-kernel patch.
    w2 = jnp.transpose(weight, (2, 3, 1, 0)).reshape(KH * KW * Cin, Cout)
    w2 = w2.astype(compute_dtype)

    compiler_params = pltpu.CompilerParams(
        dimension_semantics=("parallel", "arbitrary"),   # batch across cores; row
        vmem_limit_bytes=_vmem_limit_bytes(),            # tiles reuse the resident image
    )

    x_spec = pl.BlockSpec((1, Hp, Wp, Cin), lambda n, r: (n, 0, 0, 0))
    w_spec = pl.BlockSpec((KH * KW * Cin, Cout), lambda n, r: (0, 0))
    col_spec = pl.BlockSpec((Cout, 1), lambda n, r: (0, 0))
    y_spec = pl.BlockSpec((1, Cout, TM), lambda n, r: (n, 0, r))

    if batch_norm:
        # Pass 1: stats only (tiny output; no intermediate-y HBM round trip).
        stats = pl.pallas_call(
            functools.partial(_stats_kernel, TH=TH, Wo=Wo, KH=KH, KW=KW,
                              Cin=Cin, stride=stride),
            grid=(N, n_rt),
            in_specs=[x_spec, w_spec],
            out_specs=pl.BlockSpec((1, 1, 2, Cout), lambda n, r: (n, r, 0, 0)),
            out_shape=jax.ShapeDtypeStruct((N, n_rt, 2, Cout), jnp.float32),
            compiler_params=compiler_params,
        )(xp, w2)

        # Tiny JAX reduction -> fused per-channel scale / shift.  Conv bias is
        # intentionally dropped: it cancels exactly under train-mode mean subtraction.
        s = jnp.sum(stats, axis=(0, 1))                  # (2, Cout) f32
        mean = s[0] / M
        var = jnp.maximum(s[1] / M - mean * mean, 0.0)   # biased variance (train mode)
        inv_std = jax.lax.rsqrt(var + BN_EPS)
        g = gamma.astype(jnp.float32)
        scale = (g * inv_std).reshape(Cout, 1)
        shift = (beta.astype(jnp.float32) - mean * g * inv_std).reshape(Cout, 1)
        # TODO(synk): BatchNorm2d running_mean/var EMA buffer updates (training side
        # effect, does not affect the forward output) are not implemented.
    else:
        scale = jnp.ones((Cout, 1), jnp.float32)
        shift = bias.reshape(Cout, 1).astype(jnp.float32)

    # Pass 2: conv recomputed with the fused scale/shift (+ReLU) epilogue, written
    # lane-dense straight into the NCHW output.
    out = pl.pallas_call(
        functools.partial(_conv_apply_kernel, TH=TH, Wo=Wo, KH=KH, KW=KW,
                          Cin=Cin, stride=stride, relu=relu),
        grid=(N, n_rt),
        in_specs=[x_spec, w_spec, col_spec, col_spec],
        out_specs=y_spec,
        out_shape=jax.ShapeDtypeStruct((N, Cout, Ho * Wo), jnp.float32),
        compiler_params=compiler_params,
    )(xp, w2, scale, shift)

    return out.reshape(N, Cout, Ho, Wo)


def _reference_forward(x_nchw, weight, bias, gamma, beta, *, stride, padding,
                       relu=True, batch_norm=True, compute_dtype=jnp.bfloat16):
    """Pure-JAX reference mirroring PyTorch ConvBlock (train-mode BN).  Conv operands
    are cast to `compute_dtype` with f32 accumulation, matching the kernel's bf16
    MXU path; everything else stays f32."""
    y = jax.lax.conv_general_dilated(
        x_nchw.astype(compute_dtype), weight.astype(compute_dtype),
        window_strides=(stride, stride),
        padding=[(padding, padding), (padding, padding)],
        dimension_numbers=("NCHW", "OIHW", "NCHW"),
        preferred_element_type=jnp.float32)
    y = y + bias.reshape(1, -1, 1, 1).astype(jnp.float32)
    if batch_norm:
        mean = jnp.mean(y, axis=(0, 2, 3), keepdims=True)
        var = jnp.mean((y - mean) ** 2, axis=(0, 2, 3), keepdims=True)
        y = (y - mean) * jax.lax.rsqrt(var + BN_EPS)
        y = y * gamma.reshape(1, -1, 1, 1) + beta.reshape(1, -1, 1, 1)
    if relu:
        y = jnp.maximum(y, 0.0)
    return y


if __name__ == "__main__":
    # ConvBlock(in_channels=4, out_channels=8, kernel_size=3, stride=1, padding=1)
    N, Cin, H, W = 2, 4, 16, 16
    Cout, KH, KW = 8, 3, 3
    stride, padding = 1, 1

    key = jax.random.PRNGKey(0)
    kx, kwt, kb = jax.random.split(key, 3)
    x = jax.random.normal(kx, (N, Cin, H, W), dtype=jnp.float32)
    fan_in = Cin * KH * KW
    weight = jax.random.uniform(kwt, (Cout, Cin, KH, KW), jnp.float32,
                                minval=-1.0, maxval=1.0) / jnp.sqrt(fan_in)
    bias = jax.random.uniform(kb, (Cout,), jnp.float32,
                              minval=-1.0, maxval=1.0) / jnp.sqrt(fan_in)
    gamma = jnp.ones((Cout,), jnp.float32)   # BatchNorm2d default init
    beta = jnp.zeros((Cout,), jnp.float32)

    configs = [
        dict(relu=True, batch_norm=True, row_tile=None),   # default (full-image tile)
        dict(relu=True, batch_norm=True, row_tile=8),      # multi-tile row grid
        dict(relu=True, batch_norm=False, row_tile=8),     # conv + bias + relu only
        dict(relu=False, batch_norm=True, row_tile=None),  # conv + BN only
    ]
    for cfg in configs:
        out = conv_block_forward(x, weight, bias, gamma, beta,
                                 stride=stride, padding=padding,
                                 relu=cfg["relu"], batch_norm=cfg["batch_norm"],
                                 row_tile=cfg["row_tile"])
        out = jax.block_until_ready(out)
        ref = _reference_forward(x, weight, bias, gamma, beta,
                                 stride=stride, padding=padding,
                                 relu=cfg["relu"], batch_norm=cfg["batch_norm"])
        assert out.shape == (N, Cout, H, W), out.shape
        err = float(jnp.max(jnp.abs(out - ref)))
        assert err < 2e-3, (cfg, err)

    print("KERNEL_OK")
</pallas_src>

<mosaic_0001>
module attributes {stable_mosaic.version = 11 : i64} {
  func.func @_stats_kernel(%arg0: i32, %arg1: i32, %arg2: memref<1x18x18x4xbf16, #tpu.memory_space<vmem>>, %arg3: memref<36x8xbf16, #tpu.memory_space<vmem>>, %arg4: memref<1x1x2x8xf32, #tpu.memory_space<vmem>>) attributes {dimension_semantics = [#tpu.dimension_semantics<parallel>, #tpu.dimension_semantics<arbitrary>], iteration_bounds = array<i64: 2, 1>, scalar_prefetch = 0 : i64, scratch_operands = 0 : i64, tpu.core_type = #tpu.core_type<tc>, window_params = [{transform_indices = @transform_0, window_bounds = array<i64: 1, 18, 18, 4>}, {pipeline_mode = #tpu.pipeline_mode<synchronous>, transform_indices = @transform_1, window_bounds = array<i64: 36, 8>}, {transform_indices = @transform_2, window_bounds = array<i64: 1, 1, 2, 8>}]} {
    %c16_i32 = arith.constant 16 : i32
    %0 = arith.muli %arg1, %c16_i32 : i32
    %1 = tpu.assume_multiple %0, 16 : i32
    %c0_i32 = arith.constant 0 : i32
    %2 = arith.addi %1, %c0_i32 : i32
    %c0 = arith.constant 0 : index
    %3 = arith.index_cast %2 : i32 to index
    %c0_0 = arith.constant 0 : index
    %c0_1 = arith.constant 0 : index
    %4 = vector.load %arg2[%c0, %3, %c0_0, %c0_1] : memref<1x18x18x4xbf16, #tpu.memory_space<vmem>>, vector<1x16x16x4xbf16>
    %5 = vector.shape_cast %4 : vector<1x16x16x4xbf16> to vector<16x16x4xbf16>
    %6 = vector.shape_cast %5 : vector<16x16x4xbf16> to vector<256x4xbf16>
    %c0_i32_2 = arith.constant 0 : i32
    %7 = arith.addi %1, %c0_i32_2 : i32
    %c0_3 = arith.constant 0 : index
    %8 = arith.index_cast %7 : i32 to index
    %c1 = arith.constant 1 : index
    %c0_4 = arith.constant 0 : index
    %9 = vector.load %arg2[%c0_3, %8, %c1, %c0_4] : memref<1x18x18x4xbf16, #tpu.memory_space<vmem>>, vector<1x16x16x4xbf16>
    %10 = vector.shape_cast %9 : vector<1x16x16x4xbf16> to vector<16x16x4xbf16>
    %11 = vector.shape_cast %10 : vector<16x16x4xbf16> to vector<256x4xbf16>
    %c0_i32_5 = arith.constant 0 : i32
    %12 = arith.addi %1, %c0_i32_5 : i32
    %c0_6 = arith.constant 0 : index
    %13 = arith.index_cast %12 : i32 to index
    %c2 = arith.constant 2 : index
    %c0_7 = arith.constant 0 : index
    %14 = vector.load %arg2[%c0_6, %13, %c2, %c0_7] : memref<1x18x18x4xbf16, #tpu.memory_space<vmem>>, vector<1x16x16x4xbf16>
    %15 = vector.shape_cast %14 : vector<1x16x16x4xbf16> to vector<16x16x4xbf16>
    %16 = vector.shape_cast %15 : vector<16x16x4xbf16> to vector<256x4xbf16>
    %c1_i32 = arith.constant 1 : i32
    %17 = arith.addi %1, %c1_i32 : i32
    %c0_8 = arith.constant 0 : index
    %18 = arith.index_cast %17 : i32 to index
    %c0_9 = arith.constant 0 : index
    %c0_10 = arith.constant 0 : index
    %19 = vector.load %arg2[%c0_8, %18, %c0_9, %c0_10] : memref<1x18x18x4xbf16, #tpu.memory_space<vmem>>, vector<1x16x16x4xbf16>
    %20 = vector.shape_cast %19 : vector<1x16x16x4xbf16> to vector<16x16x4xbf16>
    %21 = vector.shape_cast %20 : vector<16x16x4xbf16> to vector<256x4xbf16>
    %c1_i32_11 = arith.constant 1 : i32
    %22 = arith.addi %1, %c1_i32_11 : i32
    %c0_12 = arith.constant 0 : index
    %23 = arith.index_cast %22 : i32 to index
    %c1_13 = arith.constant 1 : index
    %c0_14 = arith.constant 0 : index
    %24 = vector.load %arg2[%c0_12, %23, %c1_13, %c0_14] : memref<1x18x18x4xbf16, #tpu.memory_space<vmem>>, vector<1x16x16x4xbf16>
    %25 = vector.shape_cast %24 : vector<1x16x16x4xbf16> to vector<16x16x4xbf16>
    %26 = vector.shape_cast %25 : vector<16x16x4xbf16> to vector<256x4xbf16>
    %c1_i32_15 = arith.constant 1 : i32
    %27 = arith.addi %1, %c1_i32_15 : i32
    %c0_16 = arith.constant 0 : index
    %28 = arith.index_cast %27 : i32 to index
    %c2_17 = arith.constant 2 : index
    %c0_18 = arith.constant 0 : index
    %29 = vector.load %arg2[%c0_16, %28, %c2_17, %c0_18] : memref<1x18x18x4xbf16, #tpu.memory_space<vmem>>, vector<1x16x16x4xbf16>
    %30 = vector.shape_cast %29 : vector<1x16x16x4xbf16> to vector<16x16x4xbf16>
    %31 = vector.shape_cast %30 : vector<16x16x4xbf16> to vector<256x4xbf16>
    %c2_i32 = arith.constant 2 : i32
    %32 = arith.addi %1, %c2_i32 : i32
    %c0_19 = arith.constant 0 : index
    %33 = arith.index_cast %32 : i32 to index
    %c0_20 = arith.constant 0 : index
    %c0_21 = arith.constant 0 : index
    %34 = vector.load %arg2[%c0_19, %33, %c0_20, %c0_21] : memref<1x18x18x4xbf16, #tpu.memory_space<vmem>>, vector<1x16x16x4xbf16>
    %35 = vector.shape_cast %34 : vector<1x16x16x4xbf16> to vector<16x16x4xbf16>
    %36 = vector.shape_cast %35 : vector<16x16x4xbf16> to vector<256x4xbf16>
    %c2_i32_22 = arith.constant 2 : i32
    %37 = arith.addi %1, %c2_i32_22 : i32
    %c0_23 = arith.constant 0 : index
    %38 = arith.index_cast %37 : i32 to index
    %c1_24 = arith.constant 1 : index
    %c0_25 = arith.constant 0 : index
    %39 = vector.load %arg2[%c0_23, %38, %c1_24, %c0_25] : memref<1x18x18x4xbf16, #tpu.memory_space<vmem>>, vector<1x16x16x4xbf16>
    %40 = vector.shape_cast %39 : vector<1x16x16x4xbf16> to vector<16x16x4xbf16>
    %41 = vector.shape_cast %40 : vector<16x16x4xbf16> to vector<256x4xbf16>
    %c2_i32_26 = arith.constant 2 : i32
    %42 = arith.addi %1, %c2_i32_26 : i32
    %c0_27 = arith.constant 0 : index
    %43 = arith.index_cast %42 : i32 to index
    %c2_28 = arith.constant 2 : index
    %c0_29 = arith.constant 0 : index
    %44 = vector.load %arg2[%c0_27, %43, %c2_28, %c0_29] : memref<1x18x18x4xbf16, #tpu.memory_space<vmem>>, vector<1x16x16x4xbf16>
    %45 = vector.shape_cast %44 : vector<1x16x16x4xbf16> to vector<16x16x4xbf16>
    %46 = vector.shape_cast %45 : vector<16x16x4xbf16> to vector<256x4xbf16>
    %47 = tpu.concatenate %6, %11, %16, %21, %26, %31, %36, %41, %46 in 1 : vector<256x4xbf16>, vector<256x4xbf16>, vector<256x4xbf16>, vector<256x4xbf16>, vector<256x4xbf16>, vector<256x4xbf16>, vector<256x4xbf16>, vector<256x4xbf16>, vector<256x4xbf16> -> vector<256x36xbf16>
    %c0_30 = arith.constant 0 : index
    %c0_31 = arith.constant 0 : index
    %48 = vector.load %arg3[%c0_30, %c0_31] : memref<36x8xbf16, #tpu.memory_space<vmem>>, vector<36x8xbf16>
    %cst = arith.constant dense<0.000000e+00> : vector<256x8xf32>
    %49 = tpu.matmul %47, %48, %cst {dimension_numbers = #tpu.dot_dimension_numbers<[1], [0], [0], [1], [0, 0, 1, 1], [], []>} : vector<256x36xbf16>, vector<36x8xbf16>, vector<256x8xf32> -> vector<256x8xf32>
    %cst_32 = arith.constant dense<0.000000e+00> : vector<8xf32>
    %50 = vector.multi_reduction <add>, %49, %cst_32 [0] : vector<256x8xf32> to vector<8xf32>
    %51 = vector.shape_cast %50 : vector<8xf32> to vector<1x8xf32>
    %52 = arith.mulf %49, %49 : vector<256x8xf32>
    %cst_33 = arith.constant dense<0.000000e+00> : vector<8xf32>
    %53 = vector.multi_reduction <add>, %52, %cst_33 [0] : vector<256x8xf32> to vector<8xf32>
    %54 = vector.shape_cast %53 : vector<8xf32> to vector<1x8xf32>
    %55 = tpu.concatenate %51, %54 in 0 : vector<1x8xf32>, vector<1x8xf32> -> vector<2x8xf32>
    %c0_34 = arith.constant 0 : index
    %c0_35 = arith.constant 0 : index
    %c0_36 = arith.constant 0 : index
    %c0_37 = arith.constant 0 : index
    %56 = vector.load %arg4[%c0_34, %c0_35, %c0_36, %c0_37] : memref<1x1x2x8xf32, #tpu.memory_space<vmem>>, vector<1x1x2x8xf32>
    %57 = vector.shape_cast %56 : vector<1x1x2x8xf32> to vector<2x8xf32>
    %58 = vector.shape_cast %55 : vector<2x8xf32> to vector<1x1x2x8xf32>
    tpu.vector_store %arg4[%c0_34, %c0_35, %c0_36, %c0_37], %58 {strides = array<i32>} : memref<1x1x2x8xf32, #tpu.memory_space<vmem>>, vector<1x1x2x8xf32>,
    return
  }
  func.func @transform_0(%arg0: i32, %arg1: i32) -> (i32, i32, i32, i32) {
    %c0_i32 = arith.constant 0 : i32
    %c0_i32_0 = arith.constant 0 : i32
    %c0_i32_1 = arith.constant 0 : i32
    %c0_i32_2 = arith.constant 0 : i32
    return %arg0, %c0_i32, %c0_i32_0, %c0_i32_1 : i32, i32, i32, i32
  }
  func.func @transform_1(%arg0: i32, %arg1: i32) -> (i32, i32) {
    %c0_i32 = arith.constant 0 : i32
    %c0_i32_0 = arith.constant 0 : i32
    %c0_i32_1 = arith.constant 0 : i32
    return %c0_i32, %c0_i32_0 : i32, i32
  }
  func.func @transform_2(%arg0: i32, %arg1: i32) -> (i32, i32, i32, i32) {
    %c0_i32 = arith.constant 0 : i32
    %c0_i32_0 = arith.constant 0 : i32
    %c0_i32_1 = arith.constant 0 : i32
    return %arg0, %arg1, %c0_i32, %c0_i32_0 : i32, i32, i32, i32
  }
}

</mosaic_0001>

<llo_original>
// kernel: tpu_custom_call.1
$region0: #{tpu_custom_call.1}
  #allocation0 [shape = 'u32[]', space=smem, size = 0x4, offset = 0x4, fixed_abs, tag = 'smem constant byte address 0x4 - core index']
  #allocation1 [shape = 'u32[144,128]{1,0:T(1,128)}', space=vmem, size = 0x12000, scoped, tag = 'internal scratch']
  %s0 = inlined_call_operand.vmem [shape: bf16[2,18,18,4], index: 0, kind: input, shape index: {}]
  %s1 = inlined_call_operand.vmem [shape: bf16[36,8], index: 1, kind: input, shape index: {}]
  %s2 = inlined_call_operand.hbm [shape: f32[2,1,2,8], index: 2, kind: output, shape index: {}]
  %s3 = sld [smem:[#allocation0]]
  $region41: #{tpu_custom_call.1} parent=0
    _
  %s5 = ssub.s32 1, %s3
  %s6 = scalar_select 0, %s5, %s3
  $region1: #{tpu_custom_call.1} parent=0
    #allocation2 [shape = 'u8[2048]{0}', space=vmem, size = 0x800, scoped, tag = 'output window, operand 0']
    #allocation3 [shape = 's32[2]{0}', space=sflag, size = 0x8, scoped, tag = 'scoped memory for tpu_custom_call.1']
    %7 = vsyncpa [#allocation3], 0
    %s8 = scalar_lea.sflag [#allocation3], 1
    %9 = vsyncpa %s8, 0
    loop: start=0, step=1, limit=4
    $region2: #{tpu_custom_call.1} parent=1 // loop_pre_header
      _
    $region3: #{tpu_custom_call.1} parent=1 // loop_header
      %s11 = sphi 0, %s15
      %p12 = scmp.ge.s32.totalorder %s11, 4
      %s18 = sphi 0, %s30
      %s19 = sphi 0, %s26
      %s20 = sphi 0, %s18
      %s21 = sphi 0, %s19
      %s22 = sphi 0, %s20
      %s23 = sphi 0, %s21
      %s33 = sphi 0, %s35
      %s36 = sphi 0, %s33
      %s37 = sphi 0, %s36
      %s53 = sphi 0, %s37
      %s57 = sphi 0, %s57
      %s59 = sphi 0, %s57
      %s60 = sphi 0, %s59
      %s74 = sphi 0, %s60
      %s82 = sphi 0, %s84
      %s85 = sphi 0, %s82
      %s86 = sphi 0, %s85
      %s102 = sphi 0, %s86
    $region4: #{tpu_custom_call.1} parent=1 // loop_header_branch
      %14 = sbr.rel (%p12) target = $region8
    $region5: #{tpu_custom_call.1} parent=1 // loop_body
      %s16 = ssub.s32 %s11, 1
      %s17 = ssub.s32 %s11, 2
      %s24 = sadd.s32 1, %s19
      %p25 = scmp.ge.s32.totalorder %s24, 1
      %s26 = scalar_select %p25, 0, %s24
      %s27 = sadd.s32 1, %s18
      %s28 = scalar_select %p25, %s27, %s18
      %p29 = scmp.ge.s32.totalorder %s28, 2
      %s30 = scalar_select %p29, 0, %s28
      %s31 = ssub.s32 %s18, %s30
      %p32 = scmp.eq.s32.totalorder %s31, 0
      %s34 = sadd.s32 %s33, 1
      %s35 = scalar_select %p32, %s33, %s34
      %p38 = pneg %p32
      %p39 = scmp.eq.s32.totalorder %s11, 1
      %p40 = por %p38, %p39
      %p41 = scmp.ne.s32.totalorder %s33, %s36
      %p42 = scmp.eq.s32.totalorder %s11, 0
      %p43 = por %p41, %p42
      %p44 = scmp.ne.s32.totalorder %s33, %s36
      %p45 = scmp.eq.s32.totalorder %s16, 1
      %p46 = por %p44, %p45
      %p47 = scmp.ne.s32.totalorder %s36, %s37
      %p48 = scmp.eq.s32.totalorder %s16, 0
      %p49 = por %p47, %p48
      %p50 = scmp.ne.s32.totalorder %s36, %s37
      %p51 = scmp.eq.s32.totalorder %s17, 1
      %p52 = por %p50, %p51
      %p54 = scmp.ne.s32.totalorder %s37, %s53
      %p55 = scmp.eq.s32.totalorder %s17, 0
      %p56 = por %p54, %p55
      %s58 = sadd.s32 %s57, 1
      %p61 = scmp.eq.s32.totalorder %s11, 1
      %p62 = scmp.ne.s32.totalorder %s57, %s59
      %p63 = scmp.eq.s32.totalorder %s11, 0
      %p64 = por %p62, %p63
      %p65 = scmp.ne.s32.totalorder %s57, %s59
      %p66 = scmp.eq.s32.totalorder %s16, 1
      %p67 = por %p65, %p66
      %p68 = scmp.ne.s32.totalorder %s59, %s60
      %p69 = scmp.eq.s32.totalorder %s16, 0
      %p70 = por %p68, %p69
      %p71 = scmp.ne.s32.totalorder %s59, %s60
      %p72 = scmp.eq.s32.totalorder %s17, 1
      %p73 = por %p71, %p72
      %p75 = scmp.ne.s32.totalorder %s60, %s74
      %p76 = scmp.eq.s32.totalorder %s17, 0
      %p77 = por %p75, %p76
      %s78 = ssub.s32 %s18, %s30
      %s79 = ssub.s32 %s19, %s26
      %s80 = sor.u32 %s78, %s79
      %p81 = scmp.eq.s32.totalorder %s80, 0
      %s83 = sadd.s32 %s82, 1
      %s84 = scalar_select %p81, %s82, %s83
      %p87 = pneg %p81
      %p88 = scmp.eq.s32.totalorder %s11, 1
      %p89 = por %p87, %p88
      %p90 = scmp.ne.s32.totalorder %s82, %s85
      %p91 = scmp.eq.s32.totalorder %s11, 0
      %p92 = por %p90, %p91
      %p93 = scmp.ne.s32.totalorder %s82, %s85
      %p94 = scmp.eq.s32.totalorder %s16, 1
      %p95 = por %p93, %p94
      %p96 = scmp.ne.s32.totalorder %s85, %s86
      %p97 = scmp.eq.s32.totalorder %s16, 0
      %p98 = por %p96, %p97
      %p99 = scmp.ne.s32.totalorder %s85, %s86
      %p100 = scmp.eq.s32.totalorder %s17, 1
      %p101 = por %p99, %p100
      %p103 = scmp.ne.s32.totalorder %s86, %s102
      %p104 = scmp.eq.s32.totalorder %s17, 0
      %p105 = por %p103, %p104
      %p106 = scmp.le.s32.totalorder 1, %s11
      %p107 = scmp.lt.s32.totalorder %s11, 3
      %p108 = pnand %p106, %p107
      %p109 = pneg %p108
      // Predicated region
      $region9: #{tpu_custom_call.1} parent=5 // pred_check
        _
      $region10: #{tpu_custom_call.1} parent=5 // pred_check_branch
        %111 = sbr.rel (%p108) target = $region12
      $region11: #{tpu_custom_call.1} parent=5 // pred_region
        %s112 = ssub.s32 %s11, 1
        // Predicated region
        $region13: #{tpu_custom_call.1} parent=11 // pred_check
          %p113 = pneg %p70
        $region14: #{tpu_custom_call.1} parent=11 // pred_check_branch
          %115 = sbr.rel (%p113) target = $region16
        $region15: #{tpu_custom_call.1} parent=11 // pred_region
          _
        $region16: #{tpu_custom_call.1} parent=11 // pred_fallthru
          _
      $region12: #{tpu_custom_call.1} parent=5 // pred_fallthru
        _
      %p116 = scmp.lt.s32.totalorder %s11, 2
      // Predicated region
      $region17: #{tpu_custom_call.1} parent=5 // pred_check
        %p117 = pneg %p116
      $region18: #{tpu_custom_call.1} parent=5 // pred_check_branch
        %119 = sbr.rel (%p117) target = $region20
      $region19: #{tpu_custom_call.1} parent=5 // pred_region
        // Predicated region
        $region21: #{tpu_custom_call.1} parent=19 // pred_check
          %p120 = pneg %p43
        $region22: #{tpu_custom_call.1} parent=19 // pred_check_branch
          %122 = sbr.rel (%p120) target = $region24
        $region23: #{tpu_custom_call.1} parent=19 // pred_region
          %p123 = scmp.lt.s32.totalorder %s18, 1
          %s124 = scalar_select %p123, %s18, 1
          %s125 = smul.addr %s124, 54
          %s126 = smul.addr %s125, 4
          %s127 = scalar_lea.vmem %s0, %s126
        $region24: #{tpu_custom_call.1} parent=19 // pred_fallthru
          _
      $region20: #{tpu_custom_call.1} parent=5 // pred_fallthru
        _
      %p128 = scmp.le.s32.totalorder 1, %s11
      %p129 = scmp.lt.s32.totalorder %s11, 3
      %p130 = pnand %p128, %p129
      %p131 = pneg %p130
      // Predicated region
      $region25: #{tpu_custom_call.1} parent=5 // pred_check
        _
      $region26: #{tpu_custom_call.1} parent=5 // pred_check_branch
        %133 = sbr.rel (%p130) target = $region28
      $region27: #{tpu_custom_call.1} parent=5 // pred_region
        %s134 = ssub.s32 %s11, 1
        %p135 = scmp.lt.s32.totalorder %s20, 1
        %s136 = scalar_select %p135, %s20, 1
        %s137 = smul.addr %s136, 54
        %s138 = smul.addr %s137, 4
        %s139 = scalar_lea.vmem %s0, %s138
        %p140 = pneg %p49
        %p141 = pneg %p46
        %p142 = pneg %p70
        %p143 = pneg %p67
        %p144 = pneg %p98
        %p145 = pneg %p95
        %s146 = sand.u32 %s85, 1
        %s147 = scalar_lea.sflag [#allocation3], %s146
        %s148 = sand.u32 %s85, 1
        %s149 = smul.addr %s148, 2
        %s150 = scalar_lea.vmem [#allocation2], %s149
        %p151 = scmp.lt.s32.totalorder %s20, 1
        %s152 = scalar_select %p151, %s20, 1
        %s153 = smul.addr %s152, 54
        %s154 = smul.addr %s153, 4
        %s155 = scalar_lea.vmem %s0, %s154
        %s157 = smul.u32 %s21, 16
        %s158 = smul.u32 %s157, 3
        %s159 = smul.addr %s158, 4
        %s160 = scalar_lea.vmem %s155, %s159
        %v161 = vld [vmem:[%s160] sm:$0xf]
        %v162 = vld [vmem:[%s160 + $0x4] sm:$0xf]
        %v163 = vld [vmem:[%s160 + $0xc] sm:$0xf]
        %v164 = vld [vmem:[%s160 + $0x10] sm:$0xf]
        %v165 = vld [vmem:[%s160 + $0x18] sm:$0xf]
        %v166 = vld [vmem:[%s160 + $0x1c] sm:$0xf]
        %v167 = vld [vmem:[%s160 + $0x24] sm:$0xf]
        %v168 = vld [vmem:[%s160 + $0x28] sm:$0xf]
        %v169 = vld [vmem:[%s160 + $0x30] sm:$0xf]
        %v170 = vld [vmem:[%s160 + $0x34] sm:$0xf]
        %v171 = vld [vmem:[%s160 + $0x3c] sm:$0xf]
        %v172 = vld [vmem:[%s160 + $0x40] sm:$0xf]
        %v173 = vld [vmem:[%s160 + $0x48] sm:$0xf]
        %v174 = vld [vmem:[%s160 + $0x4c] sm:$0xf]
        %v175 = vld [vmem:[%s160 + $0x54] sm:$0xf]
        %v176 = vld [vmem:[%s160 + $0x58] sm:$0xf]
        %v177 = vld [vmem:[%s160 + $0x60] sm:$0xf]
        %v178 = vld [vmem:[%s160 + $0x64] sm:$0xf]
        %v179 = vld [vmem:[%s160 + $0x6c] sm:$0xf]
        %v180 = vld [vmem:[%s160 + $0x70] sm:$0xf]
        %v181 = vld [vmem:[%s160 + $0x78] sm:$0xf]
        %v182 = vld [vmem:[%s160 + $0x7c] sm:$0xf]
        %v183 = vld [vmem:[%s160 + $0x84] sm:$0xf]
        %v184 = vld [vmem:[%s160 + $0x88] sm:$0xf]
        %v185 = vld [vmem:[%s160 + $0x90] sm:$0xf]
        %v186 = vld [vmem:[%s160 + $0x94] sm:$0xf]
        %v187 = vld [vmem:[%s160 + $0x9c] sm:$0xf]
        %v188 = vld [vmem:[%s160 + $0xa0] sm:$0xf]
        %v189 = vld [vmem:[%s160 + $0xa8] sm:$0xf]
        %v190 = vld [vmem:[%s160 + $0xac] sm:$0xf]
        %v191 = vld [vmem:[%s160 + $0xb4] sm:$0xf]
        %v192 = vld [vmem:[%s160 + $0xb8] sm:$0xf]
        %v193 = vld [vmem:[%s160 + $0x8] sm:$0x1]
        %v194 = vld [vmem:[%s160 + $0x14] sm:$0x1]
        %v195 = vld [vmem:[%s160 + $0x20] sm:$0x1]
        %v196 = vld [vmem:[%s160 + $0x2c] sm:$0x1]
        %v197 = vld [vmem:[%s160 + $0x38] sm:$0x1]
        %v198 = vld [vmem:[%s160 + $0x44] sm:$0x1]
        %v199 = vld [vmem:[%s160 + $0x50] sm:$0x1]
        %v200 = vld [vmem:[%s160 + $0x5c] sm:$0x1]
        %v201 = vld [vmem:[%s160 + $0x68] sm:$0x1]
        %v202 = vld [vmem:[%s160 + $0x74] sm:$0x1]
        %v203 = vld [vmem:[%s160 + $0x80] sm:$0x1]
        %v204 = vld [vmem:[%s160 + $0x8c] sm:$0x1]
        %v205 = vld [vmem:[%s160 + $0x98] sm:$0x1]
        %v206 = vld [vmem:[%s160 + $0xa4] sm:$0x1]
        %v207 = vld [vmem:[%s160 + $0xb0] sm:$0x1]
        %v208 = vld [vmem:[%s160 + $0xbc] sm:$0x1]
        %vm209 = vsmask.f32 3328
        %vm210 = vsmask.f32 7440
        %vm211 = vmor %vm209, %vm210
        %v213 = vshrl.u32 %v161, 16
        %v215 = vrot.slane %v213, 4
        %v216 = vshll.u32 %v161, 16
        %v218 = vrot.slane %v216, 5
        %v219 = vor.u32 %v215, %v218
        %v220 = vrot.slane %v219, 4
        %v222 = vshll.u32 %v162, 16
        %v224 = vrot.slane %v222, 5
        %v225 = vsel %vm211, %v220, %v224
        %v226 = vshrl.u32 %v162, 16
        %v228 = vrot.slane %v226, 4
        %v229 = vor.u32 %v228, %v224
        %v230 = vrot.slane %v229, 4
        %v232 = vshll.u32 %v193, 16
        %v234 = vrot.slane %v232, 5
        %v235 = vsel %vm211, %v230, %v234
        %v237 = vshrl.u32 %v163, 16
        %v239 = vrot.slane %v237, 4
        %v240 = vshll.u32 %v163, 16
        %v242 = vrot.slane %v240, 5
        %v243 = vor.u32 %v239, %v242
        %v244 = vrot.slane %v243, 4
        %v246 = vshll.u32 %v164, 16
        %v248 = vrot.slane %v246, 5
        %v249 = vsel %vm211, %v244, %v248
        %v250 = vshrl.u32 %v164, 16
        %v252 = vrot.slane %v250, 4
        %v253 = vor.u32 %v252, %v248
        %v254 = vrot.slane %v253, 4
        %v256 = vshll.u32 %v194, 16
        %v258 = vrot.slane %v256, 5
        %v259 = vsel %vm211, %v254, %v258
        %v261 = vshrl.u32 %v165, 16
        %v263 = vrot.slane %v261, 4
        %v264 = vshll.u32 %v165, 16
        %v266 = vrot.slane %v264, 5
        %v267 = vor.u32 %v263, %v266
        %v268 = vrot.slane %v267, 4
        %v270 = vshll.u32 %v166, 16
        %v272 = vrot.slane %v270, 5
        %v273 = vsel %vm211, %v268, %v272
        %v274 = vshrl.u32 %v166, 16
        %v276 = vrot.slane %v274, 4
        %v277 = vor.u32 %v276, %v272
        %v278 = vrot.slane %v277, 4
        %v280 = vshll.u32 %v195, 16
        %v282 = vrot.slane %v280, 5
        %v283 = vsel %vm211, %v278, %v282
        %v285 = vshrl.u32 %v167, 16
        %v287 = vrot.slane %v285, 4
        %v288 = vshll.u32 %v167, 16
        %v290 = vrot.slane %v288, 5
        %v291 = vor.u32 %v287, %v290
        %v292 = vrot.slane %v291, 4
        %v294 = vshll.u32 %v168, 16
        %v296 = vrot.slane %v294, 5
        %v297 = vsel %vm211, %v292, %v296
        %v298 = vshrl.u32 %v168, 16
        %v300 = vrot.slane %v298, 4
        %v301 = vor.u32 %v300, %v296
        %v302 = vrot.slane %v301, 4
        %v304 = vshll.u32 %v196, 16
        %v306 = vrot.slane %v304, 5
        %v307 = vsel %vm211, %v302, %v306
        %v309 = vshrl.u32 %v169, 16
        %v311 = vrot.slane %v309, 4
        %v312 = vshll.u32 %v169, 16
        %v314 = vrot.slane %v312, 5
        %v315 = vor.u32 %v311, %v314
        %v316 = vrot.slane %v315, 4
        %v318 = vshll.u32 %v170, 16
        %v320 = vrot.slane %v318, 5
        %v321 = vsel %vm211, %v316, %v320
        %v322 = vshrl.u32 %v170, 16
        %v324 = vrot.slane %v322, 4
        %v325 = vor.u32 %v324, %v320
        %v326 = vrot.slane %v325, 4
        %v328 = vshll.u32 %v197, 16
        %v330 = vrot.slane %v328, 5
        %v331 = vsel %vm211, %v326, %v330
        %v333 = vshrl.u32 %v171, 16
        %v335 = vrot.slane %v333, 4
        %v336 = vshll.u32 %v171, 16
        %v338 = vrot.slane %v336, 5
        %v339 = vor.u32 %v335, %v338
        %v340 = vrot.slane %v339, 4
        %v342 = vshll.u32 %v172, 16
        %v344 = vrot.slane %v342, 5
        %v345 = vsel %vm211, %v340, %v344
        %v346 = vshrl.u32 %v172, 16
        %v348 = vrot.slane %v346, 4
        %v349 = vor.u32 %v348, %v344
        %v350 = vrot.slane %v349, 4
        %v352 = vshll.u32 %v198, 16
        %v354 = vrot.slane %v352, 5
        %v355 = vsel %vm211, %v350, %v354
        %v357 = vshrl.u32 %v173, 16
        %v359 = vrot.slane %v357, 4
        %v360 = vshll.u32 %v173, 16
        %v362 = vrot.slane %v360, 5
        %v363 = vor.u32 %v359, %v362
        %v364 = vrot.slane %v363, 4
        %v366 = vshll.u32 %v174, 16
        %v368 = vrot.slane %v366, 5
        %v369 = vsel %vm211, %v364, %v368
        %v370 = vshrl.u32 %v174, 16
        %v372 = vrot.slane %v370, 4
        %v373 = vor.u32 %v372, %v368
        %v374 = vrot.slane %v373, 4
        %v376 = vshll.u32 %v199, 16
        %v378 = vrot.slane %v376, 5
        %v379 = vsel %vm211, %v374, %v378
        %v381 = vshrl.u32 %v175, 16
        %v383 = vrot.slane %v381, 4
        %v384 = vshll.u32 %v175, 16
        %v386 = vrot.slane %v384, 5
        %v387 = vor.u32 %v383, %v386
        %v388 = vrot.slane %v387, 4
        %v390 = vshll.u32 %v176, 16
        %v392 = vrot.slane %v390, 5
        %v393 = vsel %vm211, %v388, %v392
        %v394 = vshrl.u32 %v176, 16
        %v396 = vrot.slane %v394, 4
        %v397 = vor.u32 %v396, %v392
        %v398 = vrot.slane %v397, 4
        %v400 = vshll.u32 %v200, 16
        %v402 = vrot.slane %v400, 5
        %v403 = vsel %vm211, %v398, %v402
        %v405 = vshrl.u32 %v177, 16
        %v407 = vrot.slane %v405, 4
        %v408 = vshll.u32 %v177, 16
        %v410 = vrot.slane %v408, 5
        %v411 = vor.u32 %v407, %v410
        %v412 = vrot.slane %v411, 4
        %v414 = vshll.u32 %v178, 16
        %v416 = vrot.slane %v414, 5
        %v417 = vsel %vm211, %v412, %v416
        %v418 = vshrl.u32 %v178, 16
        %v420 = vrot.slane %v418, 4
        %v421 = vor.u32 %v420, %v416
        %v422 = vrot.slane %v421, 4
        %v424 = vshll.u32 %v201, 16
        %v426 = vrot.slane %v424, 5
        %v427 = vsel %vm211, %v422, %v426
        %v429 = vshrl.u32 %v179, 16
        %v431 = vrot.slane %v429, 4
        %v432 = vshll.u32 %v179, 16
        %v434 = vrot.slane %v432, 5
        %v435 = vor.u32 %v431, %v434
        %v436 = vrot.slane %v435, 4
        %v438 = vshll.u32 %v180, 16
        %v440 = vrot.slane %v438, 5
        %v441 = vsel %vm211, %v436, %v440
        %v442 = vshrl.u32 %v180, 16
        %v444 = vrot.slane %v442, 4
        %v445 = vor.u32 %v444, %v440
        %v446 = vrot.slane %v445, 4
        %v448 = vshll.u32 %v202, 16
        %v450 = vrot.slane %v448, 5
        %v451 = vsel %vm211, %v446, %v450
        %v453 = vshrl.u32 %v181, 16
        %v455 = vrot.slane %v453, 4
        %v456 = vshll.u32 %v181, 16
        %v458 = vrot.slane %v456, 5
        %v459 = vor.u32 %v455, %v458
        %v460 = vrot.slane %v459, 4
        %v462 = vshll.u32 %v182, 16
        %v464 = vrot.slane %v462, 5
        %v465 = vsel %vm211, %v460, %v464
        %v466 = vshrl.u32 %v182, 16
        %v468 = vrot.slane %v466, 4
        %v469 = vor.u32 %v468, %v464
        %v470 = vrot.slane %v469, 4
        %v472 = vshll.u32 %v203, 16
        %v474 = vrot.slane %v472, 5
        %v475 = vsel %vm211, %v470, %v474
        %v477 = vshrl.u32 %v183, 16
        %v479 = vrot.slane %v477, 4
        %v480 = vshll.u32 %v183, 16
        %v482 = vrot.slane %v480, 5
        %v483 = vor.u32 %v479, %v482
        %v484 = vrot.slane %v483, 4
        %v486 = vshll.u32 %v184, 16
        %v488 = vrot.slane %v486, 5
        %v489 = vsel %vm211, %v484, %v488
        %v490 = vshrl.u32 %v184, 16
        %v492 = vrot.slane %v490, 4
        %v493 = vor.u32 %v492, %v488
        %v494 = vrot.slane %v493, 4
        %v496 = vshll.u32 %v204, 16
        %v498 = vrot.slane %v496, 5
        %v499 = vsel %vm211, %v494, %v498
        %v501 = vshrl.u32 %v185, 16
        %v503 = vrot.slane %v501, 4
        %v504 = vshll.u32 %v185, 16
        %v506 = vrot.slane %v504, 5
        %v507 = vor.u32 %v503, %v506
        %v508 = vrot.slane %v507, 4
        %v510 = vshll.u32 %v186, 16
        %v512 = vrot.slane %v510, 5
        %v513 = vsel %vm211, %v508, %v512
        %v514 = vshrl.u32 %v186, 16
        %v516 = vrot.slane %v514, 4
        %v517 = vor.u32 %v516, %v512
        %v518 = vrot.slane %v517, 4
        %v520 = vshll.u32 %v205, 16
        %v522 = vrot.slane %v520, 5
        %v523 = vsel %vm211, %v518, %v522
        %v525 = vshrl.u32 %v187, 16
        %v527 = vrot.slane %v525, 4
        %v528 = vshll.u32 %v187, 16
        %v530 = vrot.slane %v528, 5
        %v531 = vor.u32 %v527, %v530
        %v532 = vrot.slane %v531, 4
        %v534 = vshll.u32 %v188, 16
        %v536 = vrot.slane %v534, 5
        %v537 = vsel %vm211, %v532, %v536
        %v538 = vshrl.u32 %v188, 16
        %v540 = vrot.slane %v538, 4
        %v541 = vor.u32 %v540, %v536
        %v542 = vrot.slane %v541, 4
        %v544 = vshll.u32 %v206, 16
        %v546 = vrot.slane %v544, 5
        %v547 = vsel %vm211, %v542, %v546
        %v549 = vshrl.u32 %v189, 16
        %v551 = vrot.slane %v549, 4
        %v552 = vshll.u32 %v189, 16
        %v554 = vrot.slane %v552, 5
        %v555 = vor.u32 %v551, %v554
        %v556 = vrot.slane %v555, 4
        %v558 = vshll.u32 %v190, 16
        %v560 = vrot.slane %v558, 5
        %v561 = vsel %vm211, %v556, %v560
        %v562 = vshrl.u32 %v190, 16
        %v564 = vrot.slane %v562, 4
        %v565 = vor.u32 %v564, %v560
        %v566 = vrot.slane %v565, 4
        %v568 = vshll.u32 %v207, 16
        %v570 = vrot.slane %v568, 5
        %v571 = vsel %vm211, %v566, %v570
        %v573 = vshrl.u32 %v191, 16
        %v575 = vrot.slane %v573, 4
        %v576 = vshll.u32 %v191, 16
        %v578 = vrot.slane %v576, 5
        %v579 = vor.u32 %v575, %v578
        %v580 = vrot.slane %v579, 4
        %v582 = vshll.u32 %v192, 16
        %v584 = vrot.slane %v582, 5
        %v585 = vsel %vm211, %v580, %v584
        %v586 = vshrl.u32 %v192, 16
        %v588 = vrot.slane %v586, 4
        %v589 = vor.u32 %v588, %v584
        %v590 = vrot.slane %v589, 4
        %v592 = vshll.u32 %v208, 16
        %v594 = vrot.slane %v592, 5
        %v595 = vsel %vm211, %v590, %v594
        %v596 = vld [vmem:[%s160] sm:$0xe]
        %v597 = vld [vmem:[%s160 + $0xc] sm:$0xe]
        %v598 = vld [vmem:[%s160 + $0x18] sm:$0xe]
        %v599 = vld [vmem:[%s160 + $0x24] sm:$0xe]
        %v600 = vld [vmem:[%s160 + $0x30] sm:$0xe]
        %v601 = vld [vmem:[%s160 + $0x3c] sm:$0xe]
        %v602 = vld [vmem:[%s160 + $0x48] sm:$0xe]
        %v603 = vld [vmem:[%s160 + $0x54] sm:$0xe]
        %v604 = vld [vmem:[%s160 + $0x60] sm:$0xe]
        %v605 = vld [vmem:[%s160 + $0x6c] sm:$0xe]
        %v606 = vld [vmem:[%s160 + $0x78] sm:$0xe]
        %v607 = vld [vmem:[%s160 + $0x84] sm:$0xe]
        %v608 = vld [vmem:[%s160 + $0x90] sm:$0xe]
        %v609 = vld [vmem:[%s160 + $0x9c] sm:$0xe]
        %v610 = vld [vmem:[%s160 + $0xa8] sm:$0xe]
        %v611 = vld [vmem:[%s160 + $0xb4] sm:$0xe]
        %vm660 = vcmask 1042432
        %vm661 = vcmask 1046532
        %vm662 = vmor %vm660, %vm661
        %v663 = vrot.slane %v596, 5
        %v664 = vrot.slane %v663, 4
        %v665 = vrot.slane %v162, 5
        %v666 = vsel %vm662, %v664, %v665
        %v667 = vrot.slane %v665, 4
        %v668 = vrot.slane %v193, 5
        %v669 = vsel %vm662, %v667, %v668
        %v670 = vrot.slane %v597, 5
        %v671 = vrot.slane %v670, 4
        %v672 = vrot.slane %v164, 5
        %v673 = vsel %vm662, %v671, %v672
        %v674 = vrot.slane %v672, 4
        %v675 = vrot.slane %v194, 5
        %v676 = vsel %vm662, %v674, %v675
        %v677 = vrot.slane %v598, 5
        %v678 = vrot.slane %v677, 4
        %v679 = vrot.slane %v166, 5
        %v680 = vsel %vm662, %v678, %v679
        %v681 = vrot.slane %v679, 4
        %v682 = vrot.slane %v195, 5
        %v683 = vsel %vm662, %v681, %v682
        %v684 = vrot.slane %v599, 5
        %v685 = vrot.slane %v684, 4
        %v686 = vrot.slane %v168, 5
        %v687 = vsel %vm662, %v685, %v686
        %v688 = vrot.slane %v686, 4
        %v689 = vrot.slane %v196, 5
        %v690 = vsel %vm662, %v688, %v689
        %v691 = vrot.slane %v600, 5
        %v692 = vrot.slane %v691, 4
        %v693 = vrot.slane %v170, 5
        %v694 = vsel %vm662, %v692, %v693
        %v695 = vrot.slane %v693, 4
        %v696 = vrot.slane %v197, 5
        %v697 = vsel %vm662, %v695, %v696
        %v698 = vrot.slane %v601, 5
        %v699 = vrot.slane %v698, 4
        %v700 = vrot.slane %v172, 5
        %v701 = vsel %vm662, %v699, %v700
        %v702 = vrot.slane %v700, 4
        %v703 = vrot.slane %v198, 5
        %v704 = vsel %vm662, %v702, %v703
        %v705 = vrot.slane %v602, 5
        %v706 = vrot.slane %v705, 4
        %v707 = vrot.slane %v174, 5
        %v708 = vsel %vm662, %v706, %v707
        %v709 = vrot.slane %v707, 4
        %v710 = vrot.slane %v199, 5
        %v711 = vsel %vm662, %v709, %v710
        %v712 = vrot.slane %v603, 5
        %v713 = vrot.slane %v712, 4
        %v714 = vrot.slane %v176, 5
        %v715 = vsel %vm662, %v713, %v714
        %v716 = vrot.slane %v714, 4
        %v717 = vrot.slane %v200, 5
        %v718 = vsel %vm662, %v716, %v717
        %v719 = vrot.slane %v604, 5
        %v720 = vrot.slane %v719, 4
        %v721 = vrot.slane %v178, 5
        %v722 = vsel %vm662, %v720, %v721
        %v723 = vrot.slane %v721, 4
        %v724 = vrot.slane %v201, 5
        %v725 = vsel %vm662, %v723, %v724
        %v726 = vrot.slane %v605, 5
        %v727 = vrot.slane %v726, 4
        %v728 = vrot.slane %v180, 5
        %v729 = vsel %vm662, %v727, %v728
        %v730 = vrot.slane %v728, 4
        %v731 = vrot.slane %v202, 5
        %v732 = vsel %vm662, %v730, %v731
        %v733 = vrot.slane %v606, 5
        %v734 = vrot.slane %v733, 4
        %v735 = vrot.slane %v182, 5
        %v736 = vsel %vm662, %v734, %v735
        %v737 = vrot.slane %v735, 4
        %v738 = vrot.slane %v203, 5
        %v739 = vsel %vm662, %v737, %v738
        %v740 = vrot.slane %v607, 5
        %v741 = vrot.slane %v740, 4
        %v742 = vrot.slane %v184, 5
        %v743 = vsel %vm662, %v741, %v742
        %v744 = vrot.slane %v742, 4
        %v745 = vrot.slane %v204, 5
        %v746 = vsel %vm662, %v744, %v745
        %v747 = vrot.slane %v608, 5
        %v748 = vrot.slane %v747, 4
        %v749 = vrot.slane %v186, 5
        %v750 = vsel %vm662, %v748, %v749
        %v751 = vrot.slane %v749, 4
        %v752 = vrot.slane %v205, 5
        %v753 = vsel %vm662, %v751, %v752
        %v754 = vrot.slane %v609, 5
        %v755 = vrot.slane %v754, 4
        %v756 = vrot.slane %v188, 5
        %v757 = vsel %vm662, %v755, %v756
        %v758 = vrot.slane %v756, 4
        %v759 = vrot.slane %v206, 5
        %v760 = vsel %vm662, %v758, %v759
        %v761 = vrot.slane %v610, 5
        %v762 = vrot.slane %v761, 4
        %v763 = vrot.slane %v190, 5
        %v764 = vsel %vm662, %v762, %v763
        %v765 = vrot.slane %v763, 4
        %v766 = vrot.slane %v207, 5
        %v767 = vsel %vm662, %v765, %v766
        %v768 = vrot.slane %v611, 5
        %v769 = vrot.slane %v768, 4
        %v770 = vrot.slane %v192, 5
        %v771 = vsel %vm662, %v769, %v770
        %v772 = vrot.slane %v770, 4
        %v773 = vrot.slane %v208, 5
        %v774 = vsel %vm662, %v772, %v773
        %s775 = sadd.s32 %s157, 1
        %s776 = smul.u32 %s775, 3
        %s777 = smul.addr %s776, 4
        %s778 = scalar_lea.vmem %s155, %s777
        %v779 = vld [vmem:[%s778] sm:$0xf]
        %v780 = vld [vmem:[%s778 + $0x4] sm:$0xf]
        %v781 = vld [vmem:[%s778 + $0xc] sm:$0xf]
        %v782 = vld [vmem:[%s778 + $0x10] sm:$0xf]
        %v783 = vld [vmem:[%s778 + $0x18] sm:$0xf]
        %v784 = vld [vmem:[%s778 + $0x1c] sm:$0xf]
        %v785 = vld [vmem:[%s778 + $0x24] sm:$0xf]
        %v786 = vld [vmem:[%s778 + $0x28] sm:$0xf]
        %v787 = vld [vmem:[%s778 + $0x30] sm:$0xf]
        %v788 = vld [vmem:[%s778 + $0x34] sm:$0xf]
        %v789 = vld [vmem:[%s778 + $0x3c] sm:$0xf]
        %v790 = vld [vmem:[%s778 + $0x40] sm:$0xf]
        %v791 = vld [vmem:[%s778 + $0x48] sm:$0xf]
        %v792 = vld [vmem:[%s778 + $0x4c] sm:$0xf]
        %v793 = vld [vmem:[%s778 + $0x54] sm:$0xf]
        %v794 = vld [vmem:[%s778 + $0x58] sm:$0xf]
        %v795 = vld [vmem:[%s778 + $0x60] sm:$0xf]
        %v796 = vld [vmem:[%s778 + $0x64] sm:$0xf]
        %v797 = vld [vmem:[%s778 + $0x6c] sm:$0xf]
        %v798 = vld [vmem:[%s778 + $0x70] sm:$0xf]
        %v799 = vld [vmem:[%s778 + $0x78] sm:$0xf]
        %v800 = vld [vmem:[%s778 + $0x7c] sm:$0xf]
        %v801 = vld [vmem:[%s778 + $0x84] sm:$0xf]
        %v802 = vld [vmem:[%s778 + $0x88] sm:$0xf]
        %v803 = vld [vmem:[%s778 + $0x90] sm:$0xf]
        %v804 = vld [vmem:[%s778 + $0x94] sm:$0xf]
        %v805 = vld [vmem:[%s778 + $0x9c] sm:$0xf]
        %v806 = vld [vmem:[%s778 + $0xa0] sm:$0xf]
        %v807 = vld [vmem:[%s778 + $0xa8] sm:$0xf]
        %v808 = vld [vmem:[%s778 + $0xac] sm:$0xf]
        %v809 = vld [vmem:[%s778 + $0xb4] sm:$0xf]
        %v810 = vld [vmem:[%s778 + $0xb8] sm:$0xf]
        %v811 = vld [vmem:[%s778 + $0x8] sm:$0x1]
        %v812 = vld [vmem:[%s778 + $0x14] sm:$0x1]
        %v813 = vld [vmem:[%s778 + $0x20] sm:$0x1]
        %v814 = vld [vmem:[%s778 + $0x2c] sm:$0x1]
        %v815 = vld [vmem:[%s778 + $0x38] sm:$0x1]
        %v816 = vld [vmem:[%s778 + $0x44] sm:$0x1]
        %v817 = vld [vmem:[%s778 + $0x50] sm:$0x1]
        %v818 = vld [vmem:[%s778 + $0x5c] sm:$0x1]
        %v819 = vld [vmem:[%s778 + $0x68] sm:$0x1]
        %v820 = vld [vmem:[%s778 + $0x74] sm:$0x1]
        %v821 = vld [vmem:[%s778 + $0x80] sm:$0x1]
        %v822 = vld [vmem:[%s778 + $0x8c] sm:$0x1]
        %v823 = vld [vmem:[%s778 + $0x98] sm:$0x1]
        %v824 = vld [vmem:[%s778 + $0xa4] sm:$0x1]
        %v825 = vld [vmem:[%s778 + $0xb0] sm:$0x1]
        %v826 = vld [vmem:[%s778 + $0xbc] sm:$0x1]
        %v828 = vshrl.u32 %v779, 16
        %v830 = vrot.slane %v828, 4
        %v831 = vshll.u32 %v779, 16
        %v833 = vrot.slane %v831, 5
        %v834 = vor.u32 %v830, %v833
        %v835 = vrot.slane %v834, 4
        %v837 = vshll.u32 %v780, 16
        %v839 = vrot.slane %v837, 5
        %v840 = vsel %vm211, %v835, %v839
        %v841 = vshrl.u32 %v780, 16
        %v843 = vrot.slane %v841, 4
        %v844 = vor.u32 %v843, %v839
        %v845 = vrot.slane %v844, 4
        %v847 = vshll.u32 %v811, 16
        %v849 = vrot.slane %v847, 5
        %v850 = vsel %vm211, %v845, %v849
        %v852 = vshrl.u32 %v781, 16
        %v854 = vrot.slane %v852, 4
        %v855 = vshll.u32 %v781, 16
        %v857 = vrot.slane %v855, 5
        %v858 = vor.u32 %v854, %v857
        %v859 = vrot.slane %v858, 4
        %v861 = vshll.u32 %v782, 16
        %v863 = vrot.slane %v861, 5
        %v864 = vsel %vm211, %v859, %v863
        %v865 = vshrl.u32 %v782, 16
        %v867 = vrot.slane %v865, 4
        %v868 = vor.u32 %v867, %v863
        %v869 = vrot.slane %v868, 4
        %v871 = vshll.u32 %v812, 16
        %v873 = vrot.slane %v871, 5
        %v874 = vsel %vm211, %v869, %v873
        %v876 = vshrl.u32 %v783, 16
        %v878 = vrot.slane %v876, 4
        %v879 = vshll.u32 %v783, 16
        %v881 = vrot.slane %v879, 5
        %v882 = vor.u32 %v878, %v881
        %v883 = vrot.slane %v882, 4
        %v885 = vshll.u32 %v784, 16
        %v887 = vrot.slane %v885, 5
        %v888 = vsel %vm211, %v883, %v887
        %v889 = vshrl.u32 %v784, 16
        %v891 = vrot.slane %v889, 4
        %v892 = vor.u32 %v891, %v887
        %v893 = vrot.slane %v892, 4
        %v895 = vshll.u32 %v813, 16
        %v897 = vrot.slane %v895, 5
        %v898 = vsel %vm211, %v893, %v897
        %v900 = vshrl.u32 %v785, 16
        %v902 = vrot.slane %v900, 4
        %v903 = vshll.u32 %v785, 16
        %v905 = vrot.slane %v903, 5
        %v906 = vor.u32 %v902, %v905
        %v907 = vrot.slane %v906, 4
        %v909 = vshll.u32 %v786, 16
        %v911 = vrot.slane %v909, 5
        %v912 = vsel %vm211, %v907, %v911
        %v913 = vshrl.u32 %v786, 16
        %v915 = vrot.slane %v913, 4
        %v916 = vor.u32 %v915, %v911
        %v917 = vrot.slane %v916, 4
        %v919 = vshll.u32 %v814, 16
        %v921 = vrot.slane %v919, 5
        %v922 = vsel %vm211, %v917, %v921
        %v924 = vshrl.u32 %v787, 16
        %v926 = vrot.slane %v924, 4
        %v927 = vshll.u32 %v787, 16
        %v929 = vrot.slane %v927, 5
        %v930 = vor.u32 %v926, %v929
        %v931 = vrot.slane %v930, 4
        %v933 = vshll.u32 %v788, 16
        %v935 = vrot.slane %v933, 5
        %v936 = vsel %vm211, %v931, %v935
        %v937 = vshrl.u32 %v788, 16
        %v939 = vrot.slane %v937, 4
        %v940 = vor.u32 %v939, %v935
        %v941 = vrot.slane %v940, 4
        %v943 = vshll.u32 %v815, 16
        %v945 = vrot.slane %v943, 5
        %v946 = vsel %vm211, %v941, %v945
        %v948 = vshrl.u32 %v789, 16
        %v950 = vrot.slane %v948, 4
        %v951 = vshll.u32 %v789, 16
        %v953 = vrot.slane %v951, 5
        %v954 = vor.u32 %v950, %v953
        %v955 = vrot.slane %v954, 4
        %v957 = vshll.u32 %v790, 16
        %v959 = vrot.slane %v957, 5
        %v960 = vsel %vm211, %v955, %v959
        %v961 = vshrl.u32 %v790, 16
        %v963 = vrot.slane %v961, 4
        %v964 = vor.u32 %v963, %v959
        %v965 = vrot.slane %v964, 4
        %v967 = vshll.u32 %v816, 16
        %v969 = vrot.slane %v967, 5
        %v970 = vsel %vm211, %v965, %v969
        %v972 = vshrl.u32 %v791, 16
        %v974 = vrot.slane %v972, 4
        %v975 = vshll.u32 %v791, 16
        %v977 = vrot.slane %v975, 5
        %v978 = vor.u32 %v974, %v977
        %v979 = vrot.slane %v978, 4
        %v981 = vshll.u32 %v792, 16
        %v983 = vrot.slane %v981, 5
        %v984 = vsel %vm211, %v979, %v983
        %v985 = vshrl.u32 %v792, 16
        %v987 = vrot.slane %v985, 4
        %v988 = vor.u32 %v987, %v983
        %v989 = vrot.slane %v988, 4
        %v991 = vshll.u32 %v817, 16
        %v993 = vrot.slane %v991, 5
        %v994 = vsel %vm211, %v989, %v993
        %v996 = vshrl.u32 %v793, 16
        %v998 = vrot.slane %v996, 4
        %v999 = vshll.u32 %v793, 16
        %v1001 = vrot.slane %v999, 5
        %v1002 = vor.u32 %v998, %v1001
        %v1003 = vrot.slane %v1002, 4
        %v1005 = vshll.u32 %v794, 16
        %v1007 = vrot.slane %v1005, 5
        %v1008 = vsel %vm211, %v1003, %v1007
        %v1009 = vshrl.u32 %v794, 16
        %v1011 = vrot.slane %v1009, 4
        %v1012 = vor.u32 %v1011, %v1007
        %v1013 = vrot.slane %v1012, 4
        %v1015 = vshll.u32 %v818, 16
        %v1017 = vrot.slane %v1015, 5
        %v1018 = vsel %vm211, %v1013, %v1017
        %v1020 = vshrl.u32 %v795, 16
        %v1022 = vrot.slane %v1020, 4
        %v1023 = vshll.u32 %v795, 16
        %v1025 = vrot.slane %v1023, 5
        %v1026 = vor.u32 %v1022, %v1025
        %v1027 = vrot.slane %v1026, 4
        %v1029 = vshll.u32 %v796, 16
        %v1031 = vrot.slane %v1029, 5
        %v1032 = vsel %vm211, %v1027, %v1031
        %v1033 = vshrl.u32 %v796, 16
        %v1035 = vrot.slane %v1033, 4
        %v1036 = vor.u32 %v1035, %v1031
        %v1037 = vrot.slane %v1036, 4
        %v1039 = vshll.u32 %v819, 16
        %v1041 = vrot.slane %v1039, 5
        %v1042 = vsel %vm211, %v1037, %v1041
        %v1044 = vshrl.u32 %v797, 16
        %v1046 = vrot.slane %v1044, 4
        %v1047 = vshll.u32 %v797, 16
        %v1049 = vrot.slane %v1047, 5
        %v1050 = vor.u32 %v1046, %v1049
        %v1051 = vrot.slane %v1050, 4
        %v1053 = vshll.u32 %v798, 16
        %v1055 = vrot.slane %v1053, 5
        %v1056 = vsel %vm211, %v1051, %v1055
        %v1057 = vshrl.u32 %v798, 16
        %v1059 = vrot.slane %v1057, 4
        %v1060 = vor.u32 %v1059, %v1055
        %v1061 = vrot.slane %v1060, 4
        %v1063 = vshll.u32 %v820, 16
        %v1065 = vrot.slane %v1063, 5
        %v1066 = vsel %vm211, %v1061, %v1065
        %v1068 = vshrl.u32 %v799, 16
        %v1070 = vrot.slane %v1068, 4
        %v1071 = vshll.u32 %v799, 16
        %v1073 = vrot.slane %v1071, 5
        %v1074 = vor.u32 %v1070, %v1073
        %v1075 = vrot.slane %v1074, 4
        %v1077 = vshll.u32 %v800, 16
        %v1079 = vrot.slane %v1077, 5
        %v1080 = vsel %vm211, %v1075, %v1079
        %v1081 = vshrl.u32 %v800, 16
        %v1083 = vrot.slane %v1081, 4
        %v1084 = vor.u32 %v1083, %v1079
        %v1085 = vrot.slane %v1084, 4
        %v1087 = vshll.u32 %v821, 16
        %v1089 = vrot.slane %v1087, 5
        %v1090 = vsel %vm211, %v1085, %v1089
        %v1092 = vshrl.u32 %v801, 16
        %v1094 = vrot.slane %v1092, 4
        %v1095 = vshll.u32 %v801, 16
        %v1097 = vrot.slane %v1095, 5
        %v1098 = vor.u32 %v1094, %v1097
        %v1099 = vrot.slane %v1098, 4
        %v1101 = vshll.u32 %v802, 16
        %v1103 = vrot.slane %v1101, 5
        %v1104 = vsel %vm211, %v1099, %v1103
        %v1105 = vshrl.u32 %v802, 16
        %v1107 = vrot.slane %v1105, 4
        %v1108 = vor.u32 %v1107, %v1103
        %v1109 = vrot.slane %v1108, 4
        %v1111 = vshll.u32 %v822, 16
        %v1113 = vrot.slane %v1111, 5
        %v1114 = vsel %vm211, %v1109, %v1113
        %v1116 = vshrl.u32 %v803, 16
        %v1118 = vrot.slane %v1116, 4
        %v1119 = vshll.u32 %v803, 16
        %v1121 = vrot.slane %v1119, 5
        %v1122 = vor.u32 %v1118, %v1121
        %v1123 = vrot.slane %v1122, 4
        %v1125 = vshll.u32 %v804, 16
        %v1127 = vrot.slane %v1125, 5
        %v1128 = vsel %vm211, %v1123, %v1127
        %v1129 = vshrl.u32 %v804, 16
        %v1131 = vrot.slane %v1129, 4
        %v1132 = vor.u32 %v1131, %v1127
        %v1133 = vrot.slane %v1132, 4
        %v1135 = vshll.u32 %v823, 16
        %v1137 = vrot.slane %v1135, 5
        %v1138 = vsel %vm211, %v1133, %v1137
        %v1140 = vshrl.u32 %v805, 16
        %v1142 = vrot.slane %v1140, 4
        %v1143 = vshll.u32 %v805, 16
        %v1145 = vrot.slane %v1143, 5
        %v1146 = vor.u32 %v1142, %v1145
        %v1147 = vrot.slane %v1146, 4
        %v1149 = vshll.u32 %v806, 16
        %v1151 = vrot.slane %v1149, 5
        %v1152 = vsel %vm211, %v1147, %v1151
        %v1153 = vshrl.u32 %v806, 16
        %v1155 = vrot.slane %v1153, 4
        %v1156 = vor.u32 %v1155, %v1151
        %v1157 = vrot.slane %v1156, 4
        %v1159 = vshll.u32 %v824, 16
        %v1161 = vrot.slane %v1159, 5
        %v1162 = vsel %vm211, %v1157, %v1161
        %v1164 = vshrl.u32 %v807, 16
        %v1166 = vrot.slane %v1164, 4
        %v1167 = vshll.u32 %v807, 16
        %v1169 = vrot.slane %v1167, 5
        %v1170 = vor.u32 %v1166, %v1169
        %v1171 = vrot.slane %v1170, 4
        %v1173 = vshll.u32 %v808, 16
        %v1175 = vrot.slane %v1173, 5
        %v1176 = vsel %vm211, %v1171, %v1175
        %v1177 = vshrl.u32 %v808, 16
        %v1179 = vrot.slane %v1177, 4
        %v1180 = vor.u32 %v1179, %v1175
        %v1181 = vrot.slane %v1180, 4
        %v1183 = vshll.u32 %v825, 16
        %v1185 = vrot.slane %v1183, 5
        %v1186 = vsel %vm211, %v1181, %v1185
        %v1188 = vshrl.u32 %v809, 16
        %v1190 = vrot.slane %v1188, 4
        %v1191 = vshll.u32 %v809, 16
        %v1193 = vrot.slane %v1191, 5
        %v1194 = vor.u32 %v1190, %v1193
        %v1195 = vrot.slane %v1194, 4
        %v1197 = vshll.u32 %v810, 16
        %v1199 = vrot.slane %v1197, 5
        %v1200 = vsel %vm211, %v1195, %v1199
        %v1201 = vshrl.u32 %v810, 16
        %v1203 = vrot.slane %v1201, 4
        %v1204 = vor.u32 %v1203, %v1199
        %v1205 = vrot.slane %v1204, 4
        %v1207 = vshll.u32 %v826, 16
        %v1209 = vrot.slane %v1207, 5
        %v1210 = vsel %vm211, %v1205, %v1209
        %v1211 = vld [vmem:[%s778] sm:$0xe]
        %v1212 = vld [vmem:[%s778 + $0xc] sm:$0xe]
        %v1213 = vld [vmem:[%s778 + $0x18] sm:$0xe]
        %v1214 = vld [vmem:[%s778 + $0x24] sm:$0xe]
        %v1215 = vld [vmem:[%s778 + $0x30] sm:$0xe]
        %v1216 = vld [vmem:[%s778 + $0x3c] sm:$0xe]
        %v1217 = vld [vmem:[%s778 + $0x48] sm:$0xe]
        %v1218 = vld [vmem:[%s778 + $0x54] sm:$0xe]
        %v1219 = vld [vmem:[%s778 + $0x60] sm:$0xe]
        %v1220 = vld [vmem:[%s778 + $0x6c] sm:$0xe]
        %v1221 = vld [vmem:[%s778 + $0x78] sm:$0xe]
        %v1222 = vld [vmem:[%s778 + $0x84] sm:$0xe]
        %v1223 = vld [vmem:[%s778 + $0x90] sm:$0xe]
        %v1224 = vld [vmem:[%s778 + $0x9c] sm:$0xe]
        %v1225 = vld [vmem:[%s778 + $0xa8] sm:$0xe]
        %v1226 = vld [vmem:[%s778 + $0xb4] sm:$0xe]
        %v1275 = vrot.slane %v1211, 5
        %v1276 = vrot.slane %v1275, 4
        %v1277 = vrot.slane %v780, 5
        %v1278 = vsel %vm662, %v1276, %v1277
        %v1279 = vrot.slane %v1277, 4
        %v1280 = vrot.slane %v811, 5
        %v1281 = vsel %vm662, %v1279, %v1280
        %v1282 = vrot.slane %v1212, 5
        %v1283 = vrot.slane %v1282, 4
        %v1284 = vrot.slane %v782, 5
        %v1285 = vsel %vm662, %v1283, %v1284
        %v1286 = vrot.slane %v1284, 4
        %v1287 = vrot.slane %v812, 5
        %v1288 = vsel %vm662, %v1286, %v1287
        %v1289 = vrot.slane %v1213, 5
        %v1290 = vrot.slane %v1289, 4
        %v1291 = vrot.slane %v784, 5
        %v1292 = vsel %vm662, %v1290, %v1291
        %v1293 = vrot.slane %v1291, 4
        %v1294 = vrot.slane %v813, 5
        %v1295 = vsel %vm662, %v1293, %v1294
        %v1296 = vrot.slane %v1214, 5
        %v1297 = vrot.slane %v1296, 4
        %v1298 = vrot.slane %v786, 5
        %v1299 = vsel %vm662, %v1297, %v1298
        %v1300 = vrot.slane %v1298, 4
        %v1301 = vrot.slane %v814, 5
        %v1302 = vsel %vm662, %v1300, %v1301
        %v1303 = vrot.slane %v1215, 5
        %v1304 = vrot.slane %v1303, 4
        %v1305 = vrot.slane %v788, 5
        %v1306 = vsel %vm662, %v1304, %v1305
        %v1307 = vrot.slane %v1305, 4
        %v1308 = vrot.slane %v815, 5
        %v1309 = vsel %vm662, %v1307, %v1308
        %v1310 = vrot.slane %v1216, 5
        %v1311 = vrot.slane %v1310, 4
        %v1312 = vrot.slane %v790, 5
        %v1313 = vsel %vm662, %v1311, %v1312
        %v1314 = vrot.slane %v1312, 4
        %v1315 = vrot.slane %v816, 5
        %v1316 = vsel %vm662, %v1314, %v1315
        %v1317 = vrot.slane %v1217, 5
        %v1318 = vrot.slane %v1317, 4
        %v1319 = vrot.slane %v792, 5
        %v1320 = vsel %vm662, %v1318, %v1319
        %v1321 = vrot.slane %v1319, 4
        %v1322 = vrot.slane %v817, 5
        %v1323 = vsel %vm662, %v1321, %v1322
        %v1324 = vrot.slane %v1218, 5
        %v1325 = vrot.slane %v1324, 4
        %v1326 = vrot.slane %v794, 5
        %v1327 = vsel %vm662, %v1325, %v1326
        %v1328 = vrot.slane %v1326, 4
        %v1329 = vrot.slane %v818, 5
        %v1330 = vsel %vm662, %v1328, %v1329
        %v1331 = vrot.slane %v1219, 5
        %v1332 = vrot.slane %v1331, 4
        %v1333 = vrot.slane %v796, 5
        %v1334 = vsel %vm662, %v1332, %v1333
        %v1335 = vrot.slane %v1333, 4
        %v1336 = vrot.slane %v819, 5
        %v1337 = vsel %vm662, %v1335, %v1336
        %v1338 = vrot.slane %v1220, 5
        %v1339 = vrot.slane %v1338, 4
        %v1340 = vrot.slane %v798, 5
        %v1341 = vsel %vm662, %v1339, %v1340
        %v1342 = vrot.slane %v1340, 4
        %v1343 = vrot.slane %v820, 5
        %v1344 = vsel %vm662, %v1342, %v1343
        %v1345 = vrot.slane %v1221, 5
        %v1346 = vrot.slane %v1345, 4
        %v1347 = vrot.slane %v800, 5
        %v1348 = vsel %vm662, %v1346, %v1347
        %v1349 = vrot.slane %v1347, 4
        %v1350 = vrot.slane %v821, 5
        %v1351 = vsel %vm662, %v1349, %v1350
        %v1352 = vrot.slane %v1222, 5
        %v1353 = vrot.slane %v1352, 4
        %v1354 = vrot.slane %v802, 5
        %v1355 = vsel %vm662, %v1353, %v1354
        %v1356 = vrot.slane %v1354, 4
        %v1357 = vrot.slane %v822, 5
        %v1358 = vsel %vm662, %v1356, %v1357
        %v1359 = vrot.slane %v1223, 5
        %v1360 = vrot.slane %v1359, 4
        %v1361 = vrot.slane %v804, 5
        %v1362 = vsel %vm662, %v1360, %v1361
        %v1363 = vrot.slane %v1361, 4
        %v1364 = vrot.slane %v823, 5
        %v1365 = vsel %vm662, %v1363, %v1364
        %v1366 = vrot.slane %v1224, 5
        %v1367 = vrot.slane %v1366, 4
        %v1368 = vrot.slane %v806, 5
        %v1369 = vsel %vm662, %v1367, %v1368
        %v1370 = vrot.slane %v1368, 4
        %v1371 = vrot.slane %v824, 5
        %v1372 = vsel %vm662, %v1370, %v1371
        %v1373 = vrot.slane %v1225, 5
        %v1374 = vrot.slane %v1373, 4
        %v1375 = vrot.slane %v808, 5
        %v1376 = vsel %vm662, %v1374, %v1375
        %v1377 = vrot.slane %v1375, 4
        %v1378 = vrot.slane %v825, 5
        %v1379 = vsel %vm662, %v1377, %v1378
        %v1380 = vrot.slane %v1226, 5
        %v1381 = vrot.slane %v1380, 4
        %v1382 = vrot.slane %v810, 5
        %v1383 = vsel %vm662, %v1381, %v1382
        %v1384 = vrot.slane %v1382, 4
        %v1385 = vrot.slane %v826, 5
        %v1386 = vsel %vm662, %v1384, %v1385
        %s1387 = sadd.s32 %s157, 2
        %s1388 = smul.u32 %s1387, 3
        %s1389 = smul.addr %s1388, 4
        %s1390 = scalar_lea.vmem %s155, %s1389
        %v1391 = vld [vmem:[%s1390] sm:$0xf]
        %v1392 = vld [vmem:[%s1390 + $0x4] sm:$0xf]
        %v1393 = vld [vmem:[%s1390 + $0xc] sm:$0xf]
        %v1394 = vld [vmem:[%s1390 + $0x10] sm:$0xf]
        %v1395 = vld [vmem:[%s1390 + $0x18] sm:$0xf]
        %v1396 = vld [vmem:[%s1390 + $0x1c] sm:$0xf]
        %v1397 = vld [vmem:[%s1390 + $0x24] sm:$0xf]
        %v1398 = vld [vmem:[%s1390 + $0x28] sm:$0xf]
        %v1399 = vld [vmem:[%s1390 + $0x30] sm:$0xf]
        %v1400 = vld [vmem:[%s1390 + $0x34] sm:$0xf]
        %v1401 = vld [vmem:[%s1390 + $0x3c] sm:$0xf]
        %v1402 = vld [vmem:[%s1390 + $0x40] sm:$0xf]
        %v1403 = vld [vmem:[%s1390 + $0x48] sm:$0xf]
        %v1404 = vld [vmem:[%s1390 + $0x4c] sm:$0xf]
        %v1405 = vld [vmem:[%s1390 + $0x54] sm:$0xf]
        %v1406 = vld [vmem:[%s1390 + $0x58] sm:$0xf]
        %v1407 = vld [vmem:[%s1390 + $0x60] sm:$0xf]
        %v1408 = vld [vmem:[%s1390 + $0x64] sm:$0xf]
        %v1409 = vld [vmem:[%s1390 + $0x6c] sm:$0xf]
        %v1410 = vld [vmem:[%s1390 + $0x70] sm:$0xf]
        %v1411 = vld [vmem:[%s1390 + $0x78] sm:$0xf]
        %v1412 = vld [vmem:[%s1390 + $0x7c] sm:$0xf]
        %v1413 = vld [vmem:[%s1390 + $0x84] sm:$0xf]
        %v1414 = vld [vmem:[%s1390 + $0x88] sm:$0xf]
        %v1415 = vld [vmem:[%s1390 + $0x90] sm:$0xf]
        %v1416 = vld [vmem:[%s1390 + $0x94] sm:$0xf]
        %v1417 = vld [vmem:[%s1390 + $0x9c] sm:$0xf]
        %v1418 = vld [vmem:[%s1390 + $0xa0] sm:$0xf]
        %v1419 = vld [vmem:[%s1390 + $0xa8] sm:$0xf]
        %v1420 = vld [vmem:[%s1390 + $0xac] sm:$0xf]
        %v1421 = vld [vmem:[%s1390 + $0xb4] sm:$0xf]
        %v1422 = vld [vmem:[%s1390 + $0xb8] sm:$0xf]
        %v1423 = vld [vmem:[%s1390 + $0x8] sm:$0x1]
        %v1424 = vld [vmem:[%s1390 + $0x14] sm:$0x1]
        %v1425 = vld [vmem:[%s1390 + $0x20] sm:$0x1]
        %v1426 = vld [vmem:[%s1390 + $0x2c] sm:$0x1]
        %v1427 = vld [vmem:[%s1390 + $0x38] sm:$0x1]
        %v1428 = vld [vmem:[%s1390 + $0x44] sm:$0x1]
        %v1429 = vld [vmem:[%s1390 + $0x50] sm:$0x1]
        %v1430 = vld [vmem:[%s1390 + $0x5c] sm:$0x1]
        %v1431 = vld [vmem:[%s1390 + $0x68] sm:$0x1]
        %v1432 = vld [vmem:[%s1390 + $0x74] sm:$0x1]
        %v1433 = vld [vmem:[%s1390 + $0x80] sm:$0x1]
        %v1434 = vld [vmem:[%s1390 + $0x8c] sm:$0x1]
        %v1435 = vld [vmem:[%s1390 + $0x98] sm:$0x1]
        %v1436 = vld [vmem:[%s1390 + $0xa4] sm:$0x1]
        %v1437 = vld [vmem:[%s1390 + $0xb0] sm:$0x1]
        %v1438 = vld [vmem:[%s1390 + $0xbc] sm:$0x1]
        %v1440 = vshrl.u32 %v1391, 16
        %v1442 = vrot.slane %v1440, 4
        %v1443 = vshll.u32 %v1391, 16
        %v1445 = vrot.slane %v1443, 5
        %v1446 = vor.u32 %v1442, %v1445
        %v1447 = vrot.slane %v1446, 4
        %v1449 = vshll.u32 %v1392, 16
        %v1451 = vrot.slane %v1449, 5
        %v1452 = vsel %vm211, %v1447, %v1451
        %v1453 = vshrl.u32 %v1392, 16
        %v1455 = vrot.slane %v1453, 4
        %v1456 = vor.u32 %v1455, %v1451
        %v1457 = vrot.slane %v1456, 4
        %v1459 = vshll.u32 %v1423, 16
        %v1461 = vrot.slane %v1459, 5
        %v1462 = vsel %vm211, %v1457, %v1461
        %v1464 = vshrl.u32 %v1393, 16
        %v1466 = vrot.slane %v1464, 4
        %v1467 = vshll.u32 %v1393, 16
        %v1469 = vrot.slane %v1467, 5
        %v1470 = vor.u32 %v1466, %v1469
        %v1471 = vrot.slane %v1470, 4
        %v1473 = vshll.u32 %v1394, 16
        %v1475 = vrot.slane %v1473, 5
        %v1476 = vsel %vm211, %v1471, %v1475
        %v1477 = vshrl.u32 %v1394, 16
        %v1479 = vrot.slane %v1477, 4
        %v1480 = vor.u32 %v1479, %v1475
        %v1481 = vrot.slane %v1480, 4
        %v1483 = vshll.u32 %v1424, 16
        %v1485 = vrot.slane %v1483, 5
        %v1486 = vsel %vm211, %v1481, %v1485
        %v1488 = vshrl.u32 %v1395, 16
        %v1490 = vrot.slane %v1488, 4
        %v1491 = vshll.u32 %v1395, 16
        %v1493 = vrot.slane %v1491, 5
        %v1494 = vor.u32 %v1490, %v1493
        %v1495 = vrot.slane %v1494, 4
        %v1497 = vshll.u32 %v1396, 16
        %v1499 = vrot.slane %v1497, 5
        %v1500 = vsel %vm211, %v1495, %v1499
        %v1501 = vshrl.u32 %v1396, 16
        %v1503 = vrot.slane %v1501, 4
        %v1504 = vor.u32 %v1503, %v1499
        %v1505 = vrot.slane %v1504, 4
        %v1507 = vshll.u32 %v1425, 16
        %v1509 = vrot.slane %v1507, 5
        %v1510 = vsel %vm211, %v1505, %v1509
        %v1512 = vshrl.u32 %v1397, 16
        %v1514 = vrot.slane %v1512, 4
        %v1515 = vshll.u32 %v1397, 16
        %v1517 = vrot.slane %v1515, 5
        %v1518 = vor.u32 %v1514, %v1517
        %v1519 = vrot.slane %v1518, 4
        %v1521 = vshll.u32 %v1398, 16
        %v1523 = vrot.slane %v1521, 5
        %v1524 = vsel %vm211, %v1519, %v1523
        %v1525 = vshrl.u32 %v1398, 16
        %v1527 = vrot.slane %v1525, 4
        %v1528 = vor.u32 %v1527, %v1523
        %v1529 = vrot.slane %v1528, 4
        %v1531 = vshll.u32 %v1426, 16
        %v1533 = vrot.slane %v1531, 5
        %v1534 = vsel %vm211, %v1529, %v1533
        %v1536 = vshrl.u32 %v1399, 16
        %v1538 = vrot.slane %v1536, 4
        %v1539 = vshll.u32 %v1399, 16
        %v1541 = vrot.slane %v1539, 5
        %v1542 = vor.u32 %v1538, %v1541
        %v1543 = vrot.slane %v1542, 4
        %v1545 = vshll.u32 %v1400, 16
        %v1547 = vrot.slane %v1545, 5
        %v1548 = vsel %vm211, %v1543, %v1547
        %v1549 = vshrl.u32 %v1400, 16
        %v1551 = vrot.slane %v1549, 4
        %v1552 = vor.u32 %v1551, %v1547
        %v1553 = vrot.slane %v1552, 4
        %v1555 = vshll.u32 %v1427, 16
        %v1557 = vrot.slane %v1555, 5
        %v1558 = vsel %vm211, %v1553, %v1557
        %v1560 = vshrl.u32 %v1401, 16
        %v1562 = vrot.slane %v1560, 4
        %v1563 = vshll.u32 %v1401, 16
        %v1565 = vrot.slane %v1563, 5
        %v1566 = vor.u32 %v1562, %v1565
        %v1567 = vrot.slane %v1566, 4
        %v1569 = vshll.u32 %v1402, 16
        %v1571 = vrot.slane %v1569, 5
        %v1572 = vsel %vm211, %v1567, %v1571
        %v1573 = vshrl.u32 %v1402, 16
        %v1575 = vrot.slane %v1573, 4
        %v1576 = vor.u32 %v1575, %v1571
        %v1577 = vrot.slane %v1576, 4
        %v1579 = vshll.u32 %v1428, 16
        %v1581 = vrot.slane %v1579, 5
        %v1582 = vsel %vm211, %v1577, %v1581
        %v1584 = vshrl.u32 %v1403, 16
        %v1586 = vrot.slane %v1584, 4
        %v1587 = vshll.u32 %v1403, 16
        %v1589 = vrot.slane %v1587, 5
        %v1590 = vor.u32 %v1586, %v1589
        %v1591 = vrot.slane %v1590, 4
        %v1593 = vshll.u32 %v1404, 16
        %v1595 = vrot.slane %v1593, 5
        %v1596 = vsel %vm211, %v1591, %v1595
        %v1597 = vshrl.u32 %v1404, 16
        %v1599 = vrot.slane %v1597, 4
        %v1600 = vor.u32 %v1599, %v1595
        %v1601 = vrot.slane %v1600, 4
        %v1603 = vshll.u32 %v1429, 16
        %v1605 = vrot.slane %v1603, 5
        %v1606 = vsel %vm211, %v1601, %v1605
        %v1608 = vshrl.u32 %v1405, 16
        %v1610 = vrot.slane %v1608, 4
        %v1611 = vshll.u32 %v1405, 16
        %v1613 = vrot.slane %v1611, 5
        %v1614 = vor.u32 %v1610, %v1613
        %v1615 = vrot.slane %v1614, 4
        %v1617 = vshll.u32 %v1406, 16
        %v1619 = vrot.slane %v1617, 5
        %v1620 = vsel %vm211, %v1615, %v1619
        %v1621 = vshrl.u32 %v1406, 16
        %v1623 = vrot.slane %v1621, 4
        %v1624 = vor.u32 %v1623, %v1619
        %v1625 = vrot.slane %v1624, 4
        %v1627 = vshll.u32 %v1430, 16
        %v1629 = vrot.slane %v1627, 5
        %v1630 = vsel %vm211, %v1625, %v1629
        %v1632 = vshrl.u32 %v1407, 16
        %v1634 = vrot.slane %v1632, 4
        %v1635 = vshll.u32 %v1407, 16
        %v1637 = vrot.slane %v1635, 5
        %v1638 = vor.u32 %v1634, %v1637
        %v1639 = vrot.slane %v1638, 4
        %v1641 = vshll.u32 %v1408, 16
        %v1643 = vrot.slane %v1641, 5
        %v1644 = vsel %vm211, %v1639, %v1643
        %v1645 = vshrl.u32 %v1408, 16
        %v1647 = vrot.slane %v1645, 4
        %v1648 = vor.u32 %v1647, %v1643
        %v1649 = vrot.slane %v1648, 4
        %v1651 = vshll.u32 %v1431, 16
        %v1653 = vrot.slane %v1651, 5
        %v1654 = vsel %vm211, %v1649, %v1653
        %v1656 = vshrl.u32 %v1409, 16
        %v1658 = vrot.slane %v1656, 4
        %v1659 = vshll.u32 %v1409, 16
        %v1661 = vrot.slane %v1659, 5
        %v1662 = vor.u32 %v1658, %v1661
        %v1663 = vrot.slane %v1662, 4
        %v1665 = vshll.u32 %v1410, 16
        %v1667 = vrot.slane %v1665, 5
        %v1668 = vsel %vm211, %v1663, %v1667
        %v1669 = vshrl.u32 %v1410, 16
        %v1671 = vrot.slane %v1669, 4
        %v1672 = vor.u32 %v1671, %v1667
        %v1673 = vrot.slane %v1672, 4
        %v1675 = vshll.u32 %v1432, 16
        %v1677 = vrot.slane %v1675, 5
        %v1678 = vsel %vm211, %v1673, %v1677
        %v1680 = vshrl.u32 %v1411, 16
        %v1682 = vrot.slane %v1680, 4
        %v1683 = vshll.u32 %v1411, 16
        %v1685 = vrot.slane %v1683, 5
        %v1686 = vor.u32 %v1682, %v1685
        %v1687 = vrot.slane %v1686, 4
        %v1689 = vshll.u32 %v1412, 16
        %v1691 = vrot.slane %v1689, 5
        %v1692 = vsel %vm211, %v1687, %v1691
        %v1693 = vshrl.u32 %v1412, 16
        %v1695 = vrot.slane %v1693, 4
        %v1696 = vor.u32 %v1695, %v1691
        %v1697 = vrot.slane %v1696, 4
        %v1699 = vshll.u32 %v1433, 16
        %v1701 = vrot.slane %v1699, 5
        %v1702 = vsel %vm211, %v1697, %v1701
        %v1704 = vshrl.u32 %v1413, 16
        %v1706 = vrot.slane %v1704, 4
        %v1707 = vshll.u32 %v1413, 16
        %v1709 = vrot.slane %v1707, 5
        %v1710 = vor.u32 %v1706, %v1709
        %v1711 = vrot.slane %v1710, 4
        %v1713 = vshll.u32 %v1414, 16
        %v1715 = vrot.slane %v1713, 5
        %v1716 = vsel %vm211, %v1711, %v1715
        %v1717 = vshrl.u32 %v1414, 16
        %v1719 = vrot.slane %v1717, 4
        %v1720 = vor.u32 %v1719, %v1715
        %v1721 = vrot.slane %v1720, 4
        %v1723 = vshll.u32 %v1434, 16
        %v1725 = vrot.slane %v1723, 5
        %v1726 = vsel %vm211, %v1721, %v1725
        %v1728 = vshrl.u32 %v1415, 16
        %v1730 = vrot.slane %v1728, 4
        %v1731 = vshll.u32 %v1415, 16
        %v1733 = vrot.slane %v1731, 5
        %v1734 = vor.u32 %v1730, %v1733
        %v1735 = vrot.slane %v1734, 4
        %v1737 = vshll.u32 %v1416, 16
        %v1739 = vrot.slane %v1737, 5
        %v1740 = vsel %vm211, %v1735, %v1739
        %v1741 = vshrl.u32 %v1416, 16
        %v1743 = vrot.slane %v1741, 4
        %v1744 = vor.u32 %v1743, %v1739
        %v1745 = vrot.slane %v1744, 4
        %v1747 = vshll.u32 %v1435, 16
        %v1749 = vrot.slane %v1747, 5
        %v1750 = vsel %vm211, %v1745, %v1749
        %v1752 = vshrl.u32 %v1417, 16
        %v1754 = vrot.slane %v1752, 4
        %v1755 = vshll.u32 %v1417, 16
        %v1757 = vrot.slane %v1755, 5
        %v1758 = vor.u32 %v1754, %v1757
        %v1759 = vrot.slane %v1758, 4
        %v1761 = vshll.u32 %v1418, 16
        %v1763 = vrot.slane %v1761, 5
        %v1764 = vsel %vm211, %v1759, %v1763
        %v1765 = vshrl.u32 %v1418, 16
        %v1767 = vrot.slane %v1765, 4
        %v1768 = vor.u32 %v1767, %v1763
        %v1769 = vrot.slane %v1768, 4
        %v1771 = vshll.u32 %v1436, 16
        %v1773 = vrot.slane %v1771, 5
        %v1774 = vsel %vm211, %v1769, %v1773
        %v1776 = vshrl.u32 %v1419, 16
        %v1778 = vrot.slane %v1776, 4
        %v1779 = vshll.u32 %v1419, 16
        %v1781 = vrot.slane %v1779, 5
        %v1782 = vor.u32 %v1778, %v1781
        %v1783 = vrot.slane %v1782, 4
        %v1785 = vshll.u32 %v1420, 16
        %v1787 = vrot.slane %v1785, 5
        %v1788 = vsel %vm211, %v1783, %v1787
        %v1789 = vshrl.u32 %v1420, 16
        %v1791 = vrot.slane %v1789, 4
        %v1792 = vor.u32 %v1791, %v1787
        %v1793 = vrot.slane %v1792, 4
        %v1795 = vshll.u32 %v1437, 16
        %v1797 = vrot.slane %v1795, 5
        %v1798 = vsel %vm211, %v1793, %v1797
        %v1800 = vshrl.u32 %v1421, 16
        %v1802 = vrot.slane %v1800, 4
        %v1803 = vshll.u32 %v1421, 16
        %v1805 = vrot.slane %v1803, 5
        %v1806 = vor.u32 %v1802, %v1805
        %v1807 = vrot.slane %v1806, 4
        %v1809 = vshll.u32 %v1422, 16
        %v1811 = vrot.slane %v1809, 5
        %v1812 = vsel %vm211, %v1807, %v1811
        %v1813 = vshrl.u32 %v1422, 16
        %v1815 = vrot.slane %v1813, 4
        %v1816 = vor.u32 %v1815, %v1811
        %v1817 = vrot.slane %v1816, 4
        %v1819 = vshll.u32 %v1438, 16
        %v1821 = vrot.slane %v1819, 5
        %v1822 = vsel %vm211, %v1817, %v1821
        %v1823 = vld [vmem:[%s1390] sm:$0xe]
        %v1824 = vld [vmem:[%s1390 + $0xc] sm:$0xe]
        %v1825 = vld [vmem:[%s1390 + $0x18] sm:$0xe]
        %v1826 = vld [vmem:[%s1390 + $0x24] sm:$0xe]
        %v1827 = vld [vmem:[%s1390 + $0x30] sm:$0xe]
        %v1828 = vld [vmem:[%s1390 + $0x3c] sm:$0xe]
        %v1829 = vld [vmem:[%s1390 + $0x48] sm:$0xe]
        %v1830 = vld [vmem:[%s1390 + $0x54] sm:$0xe]
        %v1831 = vld [vmem:[%s1390 + $0x60] sm:$0xe]
        %v1832 = vld [vmem:[%s1390 + $0x6c] sm:$0xe]
        %v1833 = vld [vmem:[%s1390 + $0x78] sm:$0xe]
        %v1834 = vld [vmem:[%s1390 + $0x84] sm:$0xe]
        %v1835 = vld [vmem:[%s1390 + $0x90] sm:$0xe]
        %v1836 = vld [vmem:[%s1390 + $0x9c] sm:$0xe]
        %v1837 = vld [vmem:[%s1390 + $0xa8] sm:$0xe]
        %v1838 = vld [vmem:[%s1390 + $0xb4] sm:$0xe]
        %v1887 = vrot.slane %v1823, 5
        %v1888 = vrot.slane %v1887, 4
        %v1889 = vrot.slane %v1392, 5
        %v1890 = vsel %vm662, %v1888, %v1889
        %v1891 = vrot.slane %v1889, 4
        %v1892 = vrot.slane %v1423, 5
        %v1893 = vsel %vm662, %v1891, %v1892
        %v1894 = vrot.slane %v1824, 5
        %v1895 = vrot.slane %v1894, 4
        %v1896 = vrot.slane %v1394, 5
        %v1897 = vsel %vm662, %v1895, %v1896
        %v1898 = vrot.slane %v1896, 4
        %v1899 = vrot.slane %v1424, 5
        %v1900 = vsel %vm662, %v1898, %v1899
        %v1901 = vrot.slane %v1825, 5
        %v1902 = vrot.slane %v1901, 4
        %v1903 = vrot.slane %v1396, 5
        %v1904 = vsel %vm662, %v1902, %v1903
        %v1905 = vrot.slane %v1903, 4
        %v1906 = vrot.slane %v1425, 5
        %v1907 = vsel %vm662, %v1905, %v1906
        %v1908 = vrot.slane %v1826, 5
        %v1909 = vrot.slane %v1908, 4
        %v1910 = vrot.slane %v1398, 5
        %v1911 = vsel %vm662, %v1909, %v1910
        %v1912 = vrot.slane %v1910, 4
        %v1913 = vrot.slane %v1426, 5
        %v1914 = vsel %vm662, %v1912, %v1913
        %v1915 = vrot.slane %v1827, 5
        %v1916 = vrot.slane %v1915, 4
        %v1917 = vrot.slane %v1400, 5
        %v1918 = vsel %vm662, %v1916, %v1917
        %v1919 = vrot.slane %v1917, 4
        %v1920 = vrot.slane %v1427, 5
        %v1921 = vsel %vm662, %v1919, %v1920
        %v1922 = vrot.slane %v1828, 5
        %v1923 = vrot.slane %v1922, 4
        %v1924 = vrot.slane %v1402, 5
        %v1925 = vsel %vm662, %v1923, %v1924
        %v1926 = vrot.slane %v1924, 4
        %v1927 = vrot.slane %v1428, 5
        %v1928 = vsel %vm662, %v1926, %v1927
        %v1929 = vrot.slane %v1829, 5
        %v1930 = vrot.slane %v1929, 4
        %v1931 = vrot.slane %v1404, 5
        %v1932 = vsel %vm662, %v1930, %v1931
        %v1933 = vrot.slane %v1931, 4
        %v1934 = vrot.slane %v1429, 5
        %v1935 = vsel %vm662, %v1933, %v1934
        %v1936 = vrot.slane %v1830, 5
        %v1937 = vrot.slane %v1936, 4
        %v1938 = vrot.slane %v1406, 5
        %v1939 = vsel %vm662, %v1937, %v1938
        %v1940 = vrot.slane %v1938, 4
        %v1941 = vrot.slane %v1430, 5
        %v1942 = vsel %vm662, %v1940, %v1941
        %v1943 = vrot.slane %v1831, 5
        %v1944 = vrot.slane %v1943, 4
        %v1945 = vrot.slane %v1408, 5
        %v1946 = vsel %vm662, %v1944, %v1945
        %v1947 = vrot.slane %v1945, 4
        %v1948 = vrot.slane %v1431, 5
        %v1949 = vsel %vm662, %v1947, %v1948
        %v1950 = vrot.slane %v1832, 5
        %v1951 = vrot.slane %v1950, 4
        %v1952 = vrot.slane %v1410, 5
        %v1953 = vsel %vm662, %v1951, %v1952
        %v1954 = vrot.slane %v1952, 4
        %v1955 = vrot.slane %v1432, 5
        %v1956 = vsel %vm662, %v1954, %v1955
        %v1957 = vrot.slane %v1833, 5
        %v1958 = vrot.slane %v1957, 4
        %v1959 = vrot.slane %v1412, 5
        %v1960 = vsel %vm662, %v1958, %v1959
        %v1961 = vrot.slane %v1959, 4
        %v1962 = vrot.slane %v1433, 5
        %v1963 = vsel %vm662, %v1961, %v1962
        %v1964 = vrot.slane %v1834, 5
        %v1965 = vrot.slane %v1964, 4
        %v1966 = vrot.slane %v1414, 5
        %v1967 = vsel %vm662, %v1965, %v1966
        %v1968 = vrot.slane %v1966, 4
        %v1969 = vrot.slane %v1434, 5
        %v1970 = vsel %vm662, %v1968, %v1969
        %v1971 = vrot.slane %v1835, 5
        %v1972 = vrot.slane %v1971, 4
        %v1973 = vrot.slane %v1416, 5
        %v1974 = vsel %vm662, %v1972, %v1973
        %v1975 = vrot.slane %v1973, 4
        %v1976 = vrot.slane %v1435, 5
        %v1977 = vsel %vm662, %v1975, %v1976
        %v1978 = vrot.slane %v1836, 5
        %v1979 = vrot.slane %v1978, 4
        %v1980 = vrot.slane %v1418, 5
        %v1981 = vsel %vm662, %v1979, %v1980
        %v1982 = vrot.slane %v1980, 4
        %v1983 = vrot.slane %v1436, 5
        %v1984 = vsel %vm662, %v1982, %v1983
        %v1985 = vrot.slane %v1837, 5
        %v1986 = vrot.slane %v1985, 4
        %v1987 = vrot.slane %v1420, 5
        %v1988 = vsel %vm662, %v1986, %v1987
        %v1989 = vrot.slane %v1987, 4
        %v1990 = vrot.slane %v1437, 5
        %v1991 = vsel %vm662, %v1989, %v1990
        %v1992 = vrot.slane %v1838, 5
        %v1993 = vrot.slane %v1992, 4
        %v1994 = vrot.slane %v1422, 5
        %v1995 = vsel %vm662, %v1993, %v1994
        %v1996 = vrot.slane %v1994, 4
        %v1997 = vrot.slane %v1438, 5
        %v1998 = vsel %vm662, %v1996, %v1997
        %v2015 = vunpack.c.l.b16 %v161
        %v2016 = vunpack.c.l.b16 %v162
        %v2017 = vunpack.c.l.b16 %v163
        %v2018 = vunpack.c.l.b16 %v164
        %v2019 = vunpack.c.l.b16 %v165
        %v2020 = vunpack.c.l.b16 %v166
        %v2021 = vunpack.c.l.b16 %v167
        %v2022 = vunpack.c.l.b16 %v168
        %v2023 = vunpack.c.l.b16 %v169
        %v2024 = vunpack.c.l.b16 %v170
        %v2025 = vunpack.c.l.b16 %v171
        %v2026 = vunpack.c.l.b16 %v172
        %v2027 = vunpack.c.l.b16 %v173
        %v2028 = vunpack.c.l.b16 %v174
        %v2029 = vunpack.c.l.b16 %v175
        %v2030 = vunpack.c.l.b16 %v176
        %v2031 = vunpack.c.l.b16 %v177
        %v2032 = vunpack.c.l.b16 %v178
        %v2033 = vunpack.c.l.b16 %v179
        %v2034 = vunpack.c.l.b16 %v180
        %v2035 = vunpack.c.l.b16 %v181
        %v2036 = vunpack.c.l.b16 %v182
        %v2037 = vunpack.c.l.b16 %v183
        %v2038 = vunpack.c.l.b16 %v184
        %v2039 = vunpack.c.l.b16 %v185
        %v2040 = vunpack.c.l.b16 %v186
        %v2041 = vunpack.c.l.b16 %v187
        %v2042 = vunpack.c.l.b16 %v188
        %v2043 = vunpack.c.l.b16 %v189
        %v2044 = vunpack.c.l.b16 %v190
        %v2045 = vunpack.c.l.b16 %v191
        %v2046 = vunpack.c.l.b16 %v192
        %v2047 = vpack.c.b16 %v2016, %v2015
        %v2048 = vpack.c.b16 %v2018, %v2017
        %v2049 = vpack.c.b16 %v2020, %v2019
        %v2050 = vpack.c.b16 %v2022, %v2021
        %v2051 = vpack.c.b16 %v2024, %v2023
        %v2052 = vpack.c.b16 %v2026, %v2025
        %v2053 = vpack.c.b16 %v2028, %v2027
        %v2054 = vpack.c.b16 %v2030, %v2029
        %v2055 = vpack.c.b16 %v2032, %v2031
        %v2056 = vpack.c.b16 %v2034, %v2033
        %v2057 = vpack.c.b16 %v2036, %v2035
        %v2058 = vpack.c.b16 %v2038, %v2037
        %v2059 = vpack.c.b16 %v2040, %v2039
        %v2060 = vpack.c.b16 %v2042, %v2041
        %v2061 = vpack.c.b16 %v2044, %v2043
        %v2062 = vpack.c.b16 %v2046, %v2045
        %v2063 = vunpack.c.l.b16 %v225
        %v2064 = vunpack.c.l.b16 %v235
        %v2065 = vunpack.c.l.b16 %v249
        %v2066 = vunpack.c.l.b16 %v259
        %v2067 = vunpack.c.l.b16 %v273
        %v2068 = vunpack.c.l.b16 %v283
        %v2069 = vunpack.c.l.b16 %v297
        %v2070 = vunpack.c.l.b16 %v307
        %v2071 = vunpack.c.l.b16 %v321
        %v2072 = vunpack.c.l.b16 %v331
        %v2073 = vunpack.c.l.b16 %v345
        %v2074 = vunpack.c.l.b16 %v355
        %v2075 = vunpack.c.l.b16 %v369
        %v2076 = vunpack.c.l.b16 %v379
        %v2077 = vunpack.c.l.b16 %v393
        %v2078 = vunpack.c.l.b16 %v403
        %v2079 = vunpack.c.l.b16 %v417
        %v2080 = vunpack.c.l.b16 %v427
        %v2081 = vunpack.c.l.b16 %v441
        %v2082 = vunpack.c.l.b16 %v451
        %v2083 = vunpack.c.l.b16 %v465
        %v2084 = vunpack.c.l.b16 %v475
        %v2085 = vunpack.c.l.b16 %v489
        %v2086 = vunpack.c.l.b16 %v499
        %v2087 = vunpack.c.l.b16 %v513
        %v2088 = vunpack.c.l.b16 %v523
        %v2089 = vunpack.c.l.b16 %v537
        %v2090 = vunpack.c.l.b16 %v547
        %v2091 = vunpack.c.l.b16 %v561
        %v2092 = vunpack.c.l.b16 %v571
        %v2093 = vunpack.c.l.b16 %v585
        %v2094 = vunpack.c.l.b16 %v595
        %v2095 = vpack.c.b16 %v2064, %v2063
        %v2096 = vpack.c.b16 %v2066, %v2065
        %v2097 = vpack.c.b16 %v2068, %v2067
        %v2098 = vpack.c.b16 %v2070, %v2069
        %v2099 = vpack.c.b16 %v2072, %v2071
        %v2100 = vpack.c.b16 %v2074, %v2073
        %v2101 = vpack.c.b16 %v2076, %v2075
        %v2102 = vpack.c.b16 %v2078, %v2077
        %v2103 = vpack.c.b16 %v2080, %v2079
        %v2104 = vpack.c.b16 %v2082, %v2081
        %v2105 = vpack.c.b16 %v2084, %v2083
        %v2106 = vpack.c.b16 %v2086, %v2085
        %v2107 = vpack.c.b16 %v2088, %v2087
        %v2108 = vpack.c.b16 %v2090, %v2089
        %v2109 = vpack.c.b16 %v2092, %v2091
        %v2110 = vpack.c.b16 %v2094, %v2093
        %2111 = vrot.lane.b32.xlu0 %v2095, 4
        %v2112 = vpop.permute.xlu0 %2111
        %2113 = vrot.lane.b32.xlu0 %v2096, 4
        %v2114 = vpop.permute.xlu0 %2113
        %2115 = vrot.lane.b32.xlu0 %v2097, 4
        %v2116 = vpop.permute.xlu0 %2115
        %2117 = vrot.lane.b32.xlu0 %v2098, 4
        %v2118 = vpop.permute.xlu0 %2117
        %2119 = vrot.lane.b32.xlu0 %v2099, 4
        %v2120 = vpop.permute.xlu0 %2119
        %2121 = vrot.lane.b32.xlu0 %v2100, 4
        %v2122 = vpop.permute.xlu0 %2121
        %2123 = vrot.lane.b32.xlu0 %v2101, 4
        %v2124 = vpop.permute.xlu0 %2123
        %2125 = vrot.lane.b32.xlu0 %v2102, 4
        %v2126 = vpop.permute.xlu0 %2125
        %2127 = vrot.lane.b32.xlu0 %v2103, 4
        %v2128 = vpop.permute.xlu0 %2127
        %2129 = vrot.lane.b32.xlu0 %v2104, 4
        %v2130 = vpop.permute.xlu0 %2129
        %2131 = vrot.lane.b32.xlu0 %v2105, 4
        %v2132 = vpop.permute.xlu0 %2131
        %2133 = vrot.lane.b32.xlu0 %v2106, 4
        %v2134 = vpop.permute.xlu0 %2133
        %2135 = vrot.lane.b32.xlu0 %v2107, 4
        %v2136 = vpop.permute.xlu0 %2135
        %2137 = vrot.lane.b32.xlu0 %v2108, 4
        %v2138 = vpop.permute.xlu0 %2137
        %2139 = vrot.lane.b32.xlu0 %v2109, 4
        %v2140 = vpop.permute.xlu0 %2139
        %2141 = vrot.lane.b32.xlu0 %v2110, 4
        %v2142 = vpop.permute.xlu0 %2141
        %v2143 = vunpack.c.l.b16 %v666
        %v2144 = vunpack.c.l.b16 %v669
        %v2145 = vunpack.c.l.b16 %v673
        %v2146 = vunpack.c.l.b16 %v676
        %v2147 = vunpack.c.l.b16 %v680
        %v2148 = vunpack.c.l.b16 %v683
        %v2149 = vunpack.c.l.b16 %v687
        %v2150 = vunpack.c.l.b16 %v690
        %v2151 = vunpack.c.l.b16 %v694
        %v2152 = vunpack.c.l.b16 %v697
        %v2153 = vunpack.c.l.b16 %v701
        %v2154 = vunpack.c.l.b16 %v704
        %v2155 = vunpack.c.l.b16 %v708
        %v2156 = vunpack.c.l.b16 %v711
        %v2157 = vunpack.c.l.b16 %v715
        %v2158 = vunpack.c.l.b16 %v718
        %v2159 = vunpack.c.l.b16 %v722
        %v2160 = vunpack.c.l.b16 %v725
        %v2161 = vunpack.c.l.b16 %v729
        %v2162 = vunpack.c.l.b16 %v732
        %v2163 = vunpack.c.l.b16 %v736
        %v2164 = vunpack.c.l.b16 %v739
        %v2165 = vunpack.c.l.b16 %v743
        %v2166 = vunpack.c.l.b16 %v746
        %v2167 = vunpack.c.l.b16 %v750
        %v2168 = vunpack.c.l.b16 %v753
        %v2169 = vunpack.c.l.b16 %v757
        %v2170 = vunpack.c.l.b16 %v760
        %v2171 = vunpack.c.l.b16 %v764
        %v2172 = vunpack.c.l.b16 %v767
        %v2173 = vunpack.c.l.b16 %v771
        %v2174 = vunpack.c.l.b16 %v774
        %v2175 = vpack.c.b16 %v2144, %v2143
        %v2176 = vpack.c.b16 %v2146, %v2145
        %v2177 = vpack.c.b16 %v2148, %v2147
        %v2178 = vpack.c.b16 %v2150, %v2149
        %v2179 = vpack.c.b16 %v2152, %v2151
        %v2180 = vpack.c.b16 %v2154, %v2153
        %v2181 = vpack.c.b16 %v2156, %v2155
        %v2182 = vpack.c.b16 %v2158, %v2157
        %v2183 = vpack.c.b16 %v2160, %v2159
        %v2184 = vpack.c.b16 %v2162, %v2161
        %v2185 = vpack.c.b16 %v2164, %v2163
        %v2186 = vpack.c.b16 %v2166, %v2165
        %v2187 = vpack.c.b16 %v2168, %v2167
        %v2188 = vpack.c.b16 %v2170, %v2169
        %v2189 = vpack.c.b16 %v2172, %v2171
        %v2190 = vpack.c.b16 %v2174, %v2173
        %2191 = vrot.lane.b32.xlu0 %v2175, 8
        %v2192 = vpop.permute.xlu0 %2191
        %2193 = vrot.lane.b32.xlu0 %v2176, 8
        %v2194 = vpop.permute.xlu0 %2193
        %2195 = vrot.lane.b32.xlu0 %v2177, 8
        %v2196 = vpop.permute.xlu0 %2195
        %2197 = vrot.lane.b32.xlu0 %v2178, 8
        %v2198 = vpop.permute.xlu0 %2197
        %2199 = vrot.lane.b32.xlu0 %v2179, 8
        %v2200 = vpop.permute.xlu0 %2199
        %2201 = vrot.lane.b32.xlu0 %v2180, 8
        %v2202 = vpop.permute.xlu0 %2201
        %2203 = vrot.lane.b32.xlu0 %v2181, 8
        %v2204 = vpop.permute.xlu0 %2203
        %2205 = vrot.lane.b32.xlu0 %v2182, 8
        %v2206 = vpop.permute.xlu0 %2205
        %2207 = vrot.lane.b32.xlu0 %v2183, 8
        %v2208 = vpop.permute.xlu0 %2207
        %2209 = vrot.lane.b32.xlu0 %v2184, 8
        %v2210 = vpop.permute.xlu0 %2209
        %2211 = vrot.lane.b32.xlu0 %v2185, 8
        %v2212 = vpop.permute.xlu0 %2211
        %2213 = vrot.lane.b32.xlu0 %v2186, 8
        %v2214 = vpop.permute.xlu0 %2213
        %2215 = vrot.lane.b32.xlu0 %v2187, 8
        %v2216 = vpop.permute.xlu0 %2215
        %2217 = vrot.lane.b32.xlu0 %v2188, 8
        %v2218 = vpop.permute.xlu0 %2217
        %2219 = vrot.lane.b32.xlu0 %v2189, 8
        %v2220 = vpop.permute.xlu0 %2219
        %2221 = vrot.lane.b32.xlu0 %v2190, 8
        %v2222 = vpop.permute.xlu0 %2221
        %v2239 = vunpack.c.l.b16 %v779
        %v2240 = vunpack.c.l.b16 %v780
        %v2241 = vunpack.c.l.b16 %v781
        %v2242 = vunpack.c.l.b16 %v782
        %v2243 = vunpack.c.l.b16 %v783
        %v2244 = vunpack.c.l.b16 %v784
        %v2245 = vunpack.c.l.b16 %v785
        %v2246 = vunpack.c.l.b16 %v786
        %v2247 = vunpack.c.l.b16 %v787
        %v2248 = vunpack.c.l.b16 %v788
        %v2249 = vunpack.c.l.b16 %v789
        %v2250 = vunpack.c.l.b16 %v790
        %v2251 = vunpack.c.l.b16 %v791
        %v2252 = vunpack.c.l.b16 %v792
        %v2253 = vunpack.c.l.b16 %v793
        %v2254 = vunpack.c.l.b16 %v794
        %v2255 = vunpack.c.l.b16 %v795
        %v2256 = vunpack.c.l.b16 %v796
        %v2257 = vunpack.c.l.b16 %v797
        %v2258 = vunpack.c.l.b16 %v798
        %v2259 = vunpack.c.l.b16 %v799
        %v2260 = vunpack.c.l.b16 %v800
        %v2261 = vunpack.c.l.b16 %v801
        %v2262 = vunpack.c.l.b16 %v802
        %v2263 = vunpack.c.l.b16 %v803
        %v2264 = vunpack.c.l.b16 %v804
        %v2265 = vunpack.c.l.b16 %v805
        %v2266 = vunpack.c.l.b16 %v806
        %v2267 = vunpack.c.l.b16 %v807
        %v2268 = vunpack.c.l.b16 %v808
        %v2269 = vunpack.c.l.b16 %v809
        %v2270 = vunpack.c.l.b16 %v810
        %v2271 = vpack.c.b16 %v2240, %v2239
        %v2272 = vpack.c.b16 %v2242, %v2241
        %v2273 = vpack.c.b16 %v2244, %v2243
        %v2274 = vpack.c.b16 %v2246, %v2245
        %v2275 = vpack.c.b16 %v2248, %v2247
        %v2276 = vpack.c.b16 %v2250, %v2249
        %v2277 = vpack.c.b16 %v2252, %v2251
        %v2278 = vpack.c.b16 %v2254, %v2253
        %v2279 = vpack.c.b16 %v2256, %v2255
        %v2280 = vpack.c.b16 %v2258, %v2257
        %v2281 = vpack.c.b16 %v2260, %v2259
        %v2282 = vpack.c.b16 %v2262, %v2261
        %v2283 = vpack.c.b16 %v2264, %v2263
        %v2284 = vpack.c.b16 %v2266, %v2265
        %v2285 = vpack.c.b16 %v2268, %v2267
        %v2286 = vpack.c.b16 %v2270, %v2269
        %2287 = vrot.lane.b32.xlu0 %v2271, 12
        %v2288 = vpop.permute.xlu0 %2287
        %2289 = vrot.lane.b32.xlu0 %v2272, 12
        %v2290 = vpop.permute.xlu0 %2289
        %2291 = vrot.lane.b32.xlu0 %v2273, 12
        %v2292 = vpop.permute.xlu0 %2291
        %2293 = vrot.lane.b32.xlu0 %v2274, 12
        %v2294 = vpop.permute.xlu0 %2293
        %2295 = vrot.lane.b32.xlu0 %v2275, 12
        %v2296 = vpop.permute.xlu0 %2295
        %2297 = vrot.lane.b32.xlu0 %v2276, 12
        %v2298 = vpop.permute.xlu0 %2297
        %2299 = vrot.lane.b32.xlu0 %v2277, 12
        %v2300 = vpop.permute.xlu0 %2299
        %2301 = vrot.lane.b32.xlu0 %v2278, 12
        %v2302 = vpop.permute.xlu0 %2301
        %2303 = vrot.lane.b32.xlu0 %v2279, 12
        %v2304 = vpop.permute.xlu0 %2303
        %2305 = vrot.lane.b32.xlu0 %v2280, 12
        %v2306 = vpop.permute.xlu0 %2305
        %2307 = vrot.lane.b32.xlu0 %v2281, 12
        %v2308 = vpop.permute.xlu0 %2307
        %2309 = vrot.lane.b32.xlu0 %v2282, 12
        %v2310 = vpop.permute.xlu0 %2309
        %2311 = vrot.lane.b32.xlu0 %v2283, 12
        %v2312 = vpop.permute.xlu0 %2311
        %2313 = vrot.lane.b32.xlu0 %v2284, 12
        %v2314 = vpop.permute.xlu0 %2313
        %2315 = vrot.lane.b32.xlu0 %v2285, 12
        %v2316 = vpop.permute.xlu0 %2315
        %2317 = vrot.lane.b32.xlu0 %v2286, 12
        %v2318 = vpop.permute.xlu0 %2317
        %v2319 = vunpack.c.l.b16 %v840
        %v2320 = vunpack.c.l.b16 %v850
        %v2321 = vunpack.c.l.b16 %v864
        %v2322 = vunpack.c.l.b16 %v874
        %v2323 = vunpack.c.l.b16 %v888
        %v2324 = vunpack.c.l.b16 %v898
        %v2325 = vunpack.c.l.b16 %v912
        %v2326 = vunpack.c.l.b16 %v922
        %v2327 = vunpack.c.l.b16 %v936
        %v2328 = vunpack.c.l.b16 %v946
        %v2329 = vunpack.c.l.b16 %v960
        %v2330 = vunpack.c.l.b16 %v970
        %v2331 = vunpack.c.l.b16 %v984
        %v2332 = vunpack.c.l.b16 %v994
        %v2333 = vunpack.c.l.b16 %v1008
        %v2334 = vunpack.c.l.b16 %v1018
        %v2335 = vunpack.c.l.b16 %v1032
        %v2336 = vunpack.c.l.b16 %v1042
        %v2337 = vunpack.c.l.b16 %v1056
        %v2338 = vunpack.c.l.b16 %v1066
        %v2339 = vunpack.c.l.b16 %v1080
        %v2340 = vunpack.c.l.b16 %v1090
        %v2341 = vunpack.c.l.b16 %v1104
        %v2342 = vunpack.c.l.b16 %v1114
        %v2343 = vunpack.c.l.b16 %v1128
        %v2344 = vunpack.c.l.b16 %v1138
        %v2345 = vunpack.c.l.b16 %v1152
        %v2346 = vunpack.c.l.b16 %v1162
        %v2347 = vunpack.c.l.b16 %v1176
        %v2348 = vunpack.c.l.b16 %v1186
        %v2349 = vunpack.c.l.b16 %v1200
        %v2350 = vunpack.c.l.b16 %v1210
        %v2351 = vpack.c.b16 %v2320, %v2319
        %v2352 = vpack.c.b16 %v2322, %v2321
        %v2353 = vpack.c.b16 %v2324, %v2323
        %v2354 = vpack.c.b16 %v2326, %v2325
        %v2355 = vpack.c.b16 %v2328, %v2327
        %v2356 = vpack.c.b16 %v2330, %v2329
        %v2357 = vpack.c.b16 %v2332, %v2331
        %v2358 = vpack.c.b16 %v2334, %v2333
        %v2359 = vpack.c.b16 %v2336, %v2335
        %v2360 = vpack.c.b16 %v2338, %v2337
        %v2361 = vpack.c.b16 %v2340, %v2339
        %v2362 = vpack.c.b16 %v2342, %v2341
        %v2363 = vpack.c.b16 %v2344, %v2343
        %v2364 = vpack.c.b16 %v2346, %v2345
        %v2365 = vpack.c.b16 %v2348, %v2347
        %v2366 = vpack.c.b16 %v2350, %v2349
        %2367 = vrot.lane.b32.xlu0 %v2351, 16
        %v2368 = vpop.permute.xlu0 %2367
        %2369 = vrot.lane.b32.xlu0 %v2352, 16
        %v2370 = vpop.permute.xlu0 %2369
        %2371 = vrot.lane.b32.xlu0 %v2353, 16
        %v2372 = vpop.permute.xlu0 %2371
        %2373 = vrot.lane.b32.xlu0 %v2354, 16
        %v2374 = vpop.permute.xlu0 %2373
        %2375 = vrot.lane.b32.xlu0 %v2355, 16
        %v2376 = vpop.permute.xlu0 %2375
        %2377 = vrot.lane.b32.xlu0 %v2356, 16
        %v2378 = vpop.permute.xlu0 %2377
        %2379 = vrot.lane.b32.xlu0 %v2357, 16
        %v2380 = vpop.permute.xlu0 %2379
        %2381 = vrot.lane.b32.xlu0 %v2358, 16
        %v2382 = vpop.permute.xlu0 %2381
        %2383 = vrot.lane.b32.xlu0 %v2359, 16
        %v2384 = vpop.permute.xlu0 %2383
        %2385 = vrot.lane.b32.xlu0 %v2360, 16
        %v2386 = vpop.permute.xlu0 %2385
        %2387 = vrot.lane.b32.xlu0 %v2361, 16
        %v2388 = vpop.permute.xlu0 %2387
        %2389 = vrot.lane.b32.xlu0 %v2362, 16
        %v2390 = vpop.permute.xlu0 %2389
        %2391 = vrot.lane.b32.xlu0 %v2363, 16
        %v2392 = vpop.permute.xlu0 %2391
        %2393 = vrot.lane.b32.xlu0 %v2364, 16
        %v2394 = vpop.permute.xlu0 %2393
        %2395 = vrot.lane.b32.xlu0 %v2365, 16
        %v2396 = vpop.permute.xlu0 %2395
        %2397 = vrot.lane.b32.xlu0 %v2366, 16
        %v2398 = vpop.permute.xlu0 %2397
        %v2399 = vunpack.c.l.b16 %v1278
        %v2400 = vunpack.c.l.b16 %v1281
        %v2401 = vunpack.c.l.b16 %v1285
        %v2402 = vunpack.c.l.b16 %v1288
        %v2403 = vunpack.c.l.b16 %v1292
        %v2404 = vunpack.c.l.b16 %v1295
        %v2405 = vunpack.c.l.b16 %v1299
        %v2406 = vunpack.c.l.b16 %v1302
        %v2407 = vunpack.c.l.b16 %v1306
        %v2408 = vunpack.c.l.b16 %v1309
        %v2409 = vunpack.c.l.b16 %v1313
        %v2410 = vunpack.c.l.b16 %v1316
        %v2411 = vunpack.c.l.b16 %v1320
        %v2412 = vunpack.c.l.b16 %v1323
        %v2413 = vunpack.c.l.b16 %v1327
        %v2414 = vunpack.c.l.b16 %v1330
        %v2415 = vunpack.c.l.b16 %v1334
        %v2416 = vunpack.c.l.b16 %v1337
        %v2417 = vunpack.c.l.b16 %v1341
        %v2418 = vunpack.c.l.b16 %v1344
        %v2419 = vunpack.c.l.b16 %v1348
        %v2420 = vunpack.c.l.b16 %v1351
        %v2421 = vunpack.c.l.b16 %v1355
        %v2422 = vunpack.c.l.b16 %v1358
        %v2423 = vunpack.c.l.b16 %v1362
        %v2424 = vunpack.c.l.b16 %v1365
        %v2425 = vunpack.c.l.b16 %v1369
        %v2426 = vunpack.c.l.b16 %v1372
        %v2427 = vunpack.c.l.b16 %v1376
        %v2428 = vunpack.c.l.b16 %v1379
        %v2429 = vunpack.c.l.b16 %v1383
        %v2430 = vunpack.c.l.b16 %v1386
        %v2431 = vpack.c.b16 %v2400, %v2399
        %v2432 = vpack.c.b16 %v2402, %v2401
        %v2433 = vpack.c.b16 %v2404, %v2403
        %v2434 = vpack.c.b16 %v2406, %v2405
        %v2435 = vpack.c.b16 %v2408, %v2407
        %v2436 = vpack.c.b16 %v2410, %v2409
        %v2437 = vpack.c.b16 %v2412, %v2411
        %v2438 = vpack.c.b16 %v2414, %v2413
        %v2439 = vpack.c.b16 %v2416, %v2415
        %v2440 = vpack.c.b16 %v2418, %v2417
        %v2441 = vpack.c.b16 %v2420, %v2419
        %v2442 = vpack.c.b16 %v2422, %v2421
        %v2443 = vpack.c.b16 %v2424, %v2423
        %v2444 = vpack.c.b16 %v2426, %v2425
        %v2445 = vpack.c.b16 %v2428, %v2427
        %v2446 = vpack.c.b16 %v2430, %v2429
        %2447 = vrot.lane.b32.xlu0 %v2431, 20
        %v2448 = vpop.permute.xlu0 %2447
        %2449 = vrot.lane.b32.xlu0 %v2432, 20
        %v2450 = vpop.permute.xlu0 %2449
        %2451 = vrot.lane.b32.xlu0 %v2433, 20
        %v2452 = vpop.permute.xlu0 %2451
        %2453 = vrot.lane.b32.xlu0 %v2434, 20
        %v2454 = vpop.permute.xlu0 %2453
        %2455 = vrot.lane.b32.xlu0 %v2435, 20
        %v2456 = vpop.permute.xlu0 %2455
        %2457 = vrot.lane.b32.xlu0 %v2436, 20
        %v2458 = vpop.permute.xlu0 %2457
        %2459 = vrot.lane.b32.xlu0 %v2437, 20
        %v2460 = vpop.permute.xlu0 %2459
        %2461 = vrot.lane.b32.xlu0 %v2438, 20
        %v2462 = vpop.permute.xlu0 %2461
        %2463 = vrot.lane.b32.xlu0 %v2439, 20
        %v2464 = vpop.permute.xlu0 %2463
        %2465 = vrot.lane.b32.xlu0 %v2440, 20
        %v2466 = vpop.permute.xlu0 %2465
        %2467 = vrot.lane.b32.xlu0 %v2441, 20
        %v2468 = vpop.permute.xlu0 %2467
        %2469 = vrot.lane.b32.xlu0 %v2442, 20
        %v2470 = vpop.permute.xlu0 %2469
        %2471 = vrot.lane.b32.xlu0 %v2443, 20
        %v2472 = vpop.permute.xlu0 %2471
        %2473 = vrot.lane.b32.xlu0 %v2444, 20
        %v2474 = vpop.permute.xlu0 %2473
        %2475 = vrot.lane.b32.xlu0 %v2445, 20
        %v2476 = vpop.permute.xlu0 %2475
        %2477 = vrot.lane.b32.xlu0 %v2446, 20
        %v2478 = vpop.permute.xlu0 %2477
        %v2495 = vunpack.c.l.b16 %v1391
        %v2496 = vunpack.c.l.b16 %v1392
        %v2497 = vunpack.c.l.b16 %v1393
        %v2498 = vunpack.c.l.b16 %v1394
        %v2499 = vunpack.c.l.b16 %v1395
        %v2500 = vunpack.c.l.b16 %v1396
        %v2501 = vunpack.c.l.b16 %v1397
        %v2502 = vunpack.c.l.b16 %v1398
        %v2503 = vunpack.c.l.b16 %v1399
        %v2504 = vunpack.c.l.b16 %v1400
        %v2505 = vunpack.c.l.b16 %v1401
        %v2506 = vunpack.c.l.b16 %v1402
        %v2507 = vunpack.c.l.b16 %v1403
        %v2508 = vunpack.c.l.b16 %v1404
        %v2509 = vunpack.c.l.b16 %v1405
        %v2510 = vunpack.c.l.b16 %v1406
        %v2511 = vunpack.c.l.b16 %v1407
        %v2512 = vunpack.c.l.b16 %v1408
        %v2513 = vunpack.c.l.b16 %v1409
        %v2514 = vunpack.c.l.b16 %v1410
        %v2515 = vunpack.c.l.b16 %v1411
        %v2516 = vunpack.c.l.b16 %v1412
        %v2517 = vunpack.c.l.b16 %v1413
        %v2518 = vunpack.c.l.b16 %v1414
        %v2519 = vunpack.c.l.b16 %v1415
        %v2520 = vunpack.c.l.b16 %v1416
        %v2521 = vunpack.c.l.b16 %v1417
        %v2522 = vunpack.c.l.b16 %v1418
        %v2523 = vunpack.c.l.b16 %v1419
        %v2524 = vunpack.c.l.b16 %v1420
        %v2525 = vunpack.c.l.b16 %v1421
        %v2526 = vunpack.c.l.b16 %v1422
        %v2527 = vpack.c.b16 %v2496, %v2495
        %v2528 = vpack.c.b16 %v2498, %v2497
        %v2529 = vpack.c.b16 %v2500, %v2499
        %v2530 = vpack.c.b16 %v2502, %v2501
        %v2531 = vpack.c.b16 %v2504, %v2503
        %v2532 = vpack.c.b16 %v2506, %v2505
        %v2533 = vpack.c.b16 %v2508, %v2507
        %v2534 = vpack.c.b16 %v2510, %v2509
        %v2535 = vpack.c.b16 %v2512, %v2511
        %v2536 = vpack.c.b16 %v2514, %v2513
        %v2537 = vpack.c.b16 %v2516, %v2515
        %v2538 = vpack.c.b16 %v2518, %v2517
        %v2539 = vpack.c.b16 %v2520, %v2519
        %v2540 = vpack.c.b16 %v2522, %v2521
        %v2541 = vpack.c.b16 %v2524, %v2523
        %v2542 = vpack.c.b16 %v2526, %v2525
        %2543 = vrot.lane.b32.xlu0 %v2527, 24
        %v2544 = vpop.permute.xlu0 %2543
        %2545 = vrot.lane.b32.xlu0 %v2528, 24
        %v2546 = vpop.permute.xlu0 %2545
        %2547 = vrot.lane.b32.xlu0 %v2529, 24
        %v2548 = vpop.permute.xlu0 %2547
        %2549 = vrot.lane.b32.xlu0 %v2530, 24
        %v2550 = vpop.permute.xlu0 %2549
        %2551 = vrot.lane.b32.xlu0 %v2531, 24
        %v2552 = vpop.permute.xlu0 %2551
        %2553 = vrot.lane.b32.xlu0 %v2532, 24
        %v2554 = vpop.permute.xlu0 %2553
        %2555 = vrot.lane.b32.xlu0 %v2533, 24
        %v2556 = vpop.permute.xlu0 %2555
        %2557 = vrot.lane.b32.xlu0 %v2534, 24
        %v2558 = vpop.permute.xlu0 %2557
        %2559 = vrot.lane.b32.xlu0 %v2535, 24
        %v2560 = vpop.permute.xlu0 %2559
        %2561 = vrot.lane.b32.xlu0 %v2536, 24
        %v2562 = vpop.permute.xlu0 %2561
        %2563 = vrot.lane.b32.xlu0 %v2537, 24
        %v2564 = vpop.permute.xlu0 %2563
        %2565 = vrot.lane.b32.xlu0 %v2538, 24
        %v2566 = vpop.permute.xlu0 %2565
        %2567 = vrot.lane.b32.xlu0 %v2539, 24
        %v2568 = vpop.permute.xlu0 %2567
        %2569 = vrot.lane.b32.xlu0 %v2540, 24
        %v2570 = vpop.permute.xlu0 %2569
        %2571 = vrot.lane.b32.xlu0 %v2541, 24
        %v2572 = vpop.permute.xlu0 %2571
        %2573 = vrot.lane.b32.xlu0 %v2542, 24
        %v2574 = vpop.permute.xlu0 %2573
        %v2575 = vunpack.c.l.b16 %v1452
        %v2576 = vunpack.c.l.b16 %v1462
        %v2577 = vunpack.c.l.b16 %v1476
        %v2578 = vunpack.c.l.b16 %v1486
        %v2579 = vunpack.c.l.b16 %v1500
        %v2580 = vunpack.c.l.b16 %v1510
        %v2581 = vunpack.c.l.b16 %v1524
        %v2582 = vunpack.c.l.b16 %v1534
        %v2583 = vunpack.c.l.b16 %v1548
        %v2584 = vunpack.c.l.b16 %v1558
        %v2585 = vunpack.c.l.b16 %v1572
        %v2586 = vunpack.c.l.b16 %v1582
        %v2587 = vunpack.c.l.b16 %v1596
        %v2588 = vunpack.c.l.b16 %v1606
        %v2589 = vunpack.c.l.b16 %v1620
        %v2590 = vunpack.c.l.b16 %v1630
        %v2591 = vunpack.c.l.b16 %v1644
        %v2592 = vunpack.c.l.b16 %v1654
        %v2593 = vunpack.c.l.b16 %v1668
        %v2594 = vunpack.c.l.b16 %v1678
        %v2595 = vunpack.c.l.b16 %v1692
        %v2596 = vunpack.c.l.b16 %v1702
        %v2597 = vunpack.c.l.b16 %v1716
        %v2598 = vunpack.c.l.b16 %v1726
        %v2599 = vunpack.c.l.b16 %v1740
        %v2600 = vunpack.c.l.b16 %v1750
        %v2601 = vunpack.c.l.b16 %v1764
        %v2602 = vunpack.c.l.b16 %v1774
        %v2603 = vunpack.c.l.b16 %v1788
        %v2604 = vunpack.c.l.b16 %v1798
        %v2605 = vunpack.c.l.b16 %v1812
        %v2606 = vunpack.c.l.b16 %v1822
        %v2607 = vpack.c.b16 %v2576, %v2575
        %v2608 = vpack.c.b16 %v2578, %v2577
        %v2609 = vpack.c.b16 %v2580, %v2579
        %v2610 = vpack.c.b16 %v2582, %v2581
        %v2611 = vpack.c.b16 %v2584, %v2583
        %v2612 = vpack.c.b16 %v2586, %v2585
        %v2613 = vpack.c.b16 %v2588, %v2587
        %v2614 = vpack.c.b16 %v2590, %v2589
        %v2615 = vpack.c.b16 %v2592, %v2591
        %v2616 = vpack.c.b16 %v2594, %v2593
        %v2617 = vpack.c.b16 %v2596, %v2595
        %v2618 = vpack.c.b16 %v2598, %v2597
        %v2619 = vpack.c.b16 %v2600, %v2599
        %v2620 = vpack.c.b16 %v2602, %v2601
        %v2621 = vpack.c.b16 %v2604, %v2603
        %v2622 = vpack.c.b16 %v2606, %v2605
        %2623 = vrot.lane.b32.xlu0 %v2607, 28
        %v2624 = vpop.permute.xlu0 %2623
        %2625 = vrot.lane.b32.xlu0 %v2608, 28
        %v2626 = vpop.permute.xlu0 %2625
        %2627 = vrot.lane.b32.xlu0 %v2609, 28
        %v2628 = vpop.permute.xlu0 %2627
        %2629 = vrot.lane.b32.xlu0 %v2610, 28
        %v2630 = vpop.permute.xlu0 %2629
        %2631 = vrot.lane.b32.xlu0 %v2611, 28
        %v2632 = vpop.permute.xlu0 %2631
        %2633 = vrot.lane.b32.xlu0 %v2612, 28
        %v2634 = vpop.permute.xlu0 %2633
        %2635 = vrot.lane.b32.xlu0 %v2613, 28
        %v2636 = vpop.permute.xlu0 %2635
        %2637 = vrot.lane.b32.xlu0 %v2614, 28
        %v2638 = vpop.permute.xlu0 %2637
        %2639 = vrot.lane.b32.xlu0 %v2615, 28
        %v2640 = vpop.permute.xlu0 %2639
        %2641 = vrot.lane.b32.xlu0 %v2616, 28
        %v2642 = vpop.permute.xlu0 %2641
        %2643 = vrot.lane.b32.xlu0 %v2617, 28
        %v2644 = vpop.permute.xlu0 %2643
        %2645 = vrot.lane.b32.xlu0 %v2618, 28
        %v2646 = vpop.permute.xlu0 %2645
        %2647 = vrot.lane.b32.xlu0 %v2619, 28
        %v2648 = vpop.permute.xlu0 %2647
        %2649 = vrot.lane.b32.xlu0 %v2620, 28
        %v2650 = vpop.permute.xlu0 %2649
        %2651 = vrot.lane.b32.xlu0 %v2621, 28
        %v2652 = vpop.permute.xlu0 %2651
        %2653 = vrot.lane.b32.xlu0 %v2622, 28
        %v2654 = vpop.permute.xlu0 %2653
        %v2655 = vunpack.c.l.b16 %v1890
        %v2656 = vunpack.c.l.b16 %v1893
        %v2657 = vunpack.c.l.b16 %v1897
        %v2658 = vunpack.c.l.b16 %v1900
        %v2659 = vunpack.c.l.b16 %v1904
        %v2660 = vunpack.c.l.b16 %v1907
        %v2661 = vunpack.c.l.b16 %v1911
        %v2662 = vunpack.c.l.b16 %v1914
        %v2663 = vunpack.c.l.b16 %v1918
        %v2664 = vunpack.c.l.b16 %v1921
        %v2665 = vunpack.c.l.b16 %v1925
        %v2666 = vunpack.c.l.b16 %v1928
        %v2667 = vunpack.c.l.b16 %v1932
        %v2668 = vunpack.c.l.b16 %v1935
        %v2669 = vunpack.c.l.b16 %v1939
        %v2670 = vunpack.c.l.b16 %v1942
        %v2671 = vunpack.c.l.b16 %v1946
        %v2672 = vunpack.c.l.b16 %v1949
        %v2673 = vunpack.c.l.b16 %v1953
        %v2674 = vunpack.c.l.b16 %v1956
        %v2675 = vunpack.c.l.b16 %v1960
        %v2676 = vunpack.c.l.b16 %v1963
        %v2677 = vunpack.c.l.b16 %v1967
        %v2678 = vunpack.c.l.b16 %v1970
        %v2679 = vunpack.c.l.b16 %v1974
        %v2680 = vunpack.c.l.b16 %v1977
        %v2681 = vunpack.c.l.b16 %v1981
        %v2682 = vunpack.c.l.b16 %v1984
        %v2683 = vunpack.c.l.b16 %v1988
        %v2684 = vunpack.c.l.b16 %v1991
        %v2685 = vunpack.c.l.b16 %v1995
        %v2686 = vunpack.c.l.b16 %v1998
        %v2687 = vpack.c.b16 %v2656, %v2655
        %v2688 = vpack.c.b16 %v2658, %v2657
        %v2689 = vpack.c.b16 %v2660, %v2659
        %v2690 = vpack.c.b16 %v2662, %v2661
        %v2691 = vpack.c.b16 %v2664, %v2663
        %v2692 = vpack.c.b16 %v2666, %v2665
        %v2693 = vpack.c.b16 %v2668, %v2667
        %v2694 = vpack.c.b16 %v2670, %v2669
        %v2695 = vpack.c.b16 %v2672, %v2671
        %v2696 = vpack.c.b16 %v2674, %v2673
        %v2697 = vpack.c.b16 %v2676, %v2675
        %v2698 = vpack.c.b16 %v2678, %v2677
        %v2699 = vpack.c.b16 %v2680, %v2679
        %v2700 = vpack.c.b16 %v2682, %v2681
        %v2701 = vpack.c.b16 %v2684, %v2683
        %v2702 = vpack.c.b16 %v2686, %v2685
        %2703 = vrot.lane.b32.xlu0 %v2687, 32
        %v2704 = vpop.permute.xlu0 %2703
        %2705 = vrot.lane.b32.xlu0 %v2688, 32
        %v2706 = vpop.permute.xlu0 %2705
        %2707 = vrot.lane.b32.xlu0 %v2689, 32
        %v2708 = vpop.permute.xlu0 %2707
        %2709 = vrot.lane.b32.xlu0 %v2690, 32
        %v2710 = vpop.permute.xlu0 %2709
        %2711 = vrot.lane.b32.xlu0 %v2691, 32
        %v2712 = vpop.permute.xlu0 %2711
        %2713 = vrot.lane.b32.xlu0 %v2692, 32
        %v2714 = vpop.permute.xlu0 %2713
        %2715 = vrot.lane.b32.xlu0 %v2693, 32
        %v2716 = vpop.permute.xlu0 %2715
        %2717 = vrot.lane.b32.xlu0 %v2694, 32
        %v2718 = vpop.permute.xlu0 %2717
        %2719 = vrot.lane.b32.xlu0 %v2695, 32
        %v2720 = vpop.permute.xlu0 %2719
        %2721 = vrot.lane.b32.xlu0 %v2696, 32
        %v2722 = vpop.permute.xlu0 %2721
        %2723 = vrot.lane.b32.xlu0 %v2697, 32
        %v2724 = vpop.permute.xlu0 %2723
        %2725 = vrot.lane.b32.xlu0 %v2698, 32
        %v2726 = vpop.permute.xlu0 %2725
        %2727 = vrot.lane.b32.xlu0 %v2699, 32
        %v2728 = vpop.permute.xlu0 %2727
        %2729 = vrot.lane.b32.xlu0 %v2700, 32
        %v2730 = vpop.permute.xlu0 %2729
        %2731 = vrot.lane.b32.xlu0 %v2701, 32
        %v2732 = vpop.permute.xlu0 %2731
        %2733 = vrot.lane.b32.xlu0 %v2702, 32
        %v2734 = vpop.permute.xlu0 %2733
        %vm2735 = vcmask 31744
        %v2738 = vsel %vm2735, %v2047, %v2112
        %v2741 = vsel %vm2735, %v2048, %v2114
        %v2744 = vsel %vm2735, %v2049, %v2116
        %v2747 = vsel %vm2735, %v2050, %v2118
        %v2750 = vsel %vm2735, %v2051, %v2120
        %v2753 = vsel %vm2735, %v2052, %v2122
        %v2756 = vsel %vm2735, %v2053, %v2124
        %v2759 = vsel %vm2735, %v2054, %v2126
        %v2762 = vsel %vm2735, %v2055, %v2128
        %v2765 = vsel %vm2735, %v2056, %v2130
        %v2768 = vsel %vm2735, %v2057, %v2132
        %v2771 = vsel %vm2735, %v2058, %v2134
        %v2774 = vsel %vm2735, %v2059, %v2136
        %v2777 = vsel %vm2735, %v2060, %v2138
        %v2780 = vsel %vm2735, %v2061, %v2140
        %v2783 = vsel %vm2735, %v2062, %v2142
        %vm2784 = vcmask 64512
        %v2786 = vsel %vm2784, %v2738, %v2192
        %v2788 = vsel %vm2784, %v2741, %v2194
        %v2790 = vsel %vm2784, %v2744, %v2196
        %v2792 = vsel %vm2784, %v2747, %v2198
        %v2794 = vsel %vm2784, %v2750, %v2200
        %v2796 = vsel %vm2784, %v2753, %v2202
        %v2798 = vsel %vm2784, %v2756, %v2204
        %v2800 = vsel %vm2784, %v2759, %v2206
        %v2802 = vsel %vm2784, %v2762, %v2208
        %v2804 = vsel %vm2784, %v2765, %v2210
        %v2806 = vsel %vm2784, %v2768, %v2212
        %v2808 = vsel %vm2784, %v2771, %v2214
        %v2810 = vsel %vm2784, %v2774, %v2216
        %v2812 = vsel %vm2784, %v2777, %v2218
        %v2814 = vsel %vm2784, %v2780, %v2220
        %v2816 = vsel %vm2784, %v2783, %v2222
        %vm2817 = vcmask 97280
        %v2819 = vsel %vm2817, %v2786, %v2288
        %v2821 = vsel %vm2817, %v2788, %v2290
        %v2823 = vsel %vm2817, %v2790, %v2292
        %v2825 = vsel %vm2817, %v2792, %v2294
        %v2827 = vsel %vm2817, %v2794, %v2296
        %v2829 = vsel %vm2817, %v2796, %v2298
        %v2831 = vsel %vm2817, %v2798, %v2300
        %v2833 = vsel %vm2817, %v2800, %v2302
        %v2835 = vsel %vm2817, %v2802, %v2304
        %v2837 = vsel %vm2817, %v2804, %v2306
        %v2839 = vsel %vm2817, %v2806, %v2308
        %v2841 = vsel %vm2817, %v2808, %v2310
        %v2843 = vsel %vm2817, %v2810, %v2312
        %v2845 = vsel %vm2817, %v2812, %v2314
        %v2847 = vsel %vm2817, %v2814, %v2316
        %v2849 = vsel %vm2817, %v2816, %v2318
        %vm2850 = vcmask 130048
        %v2852 = vsel %vm2850, %v2819, %v2368
        %v2854 = vsel %vm2850, %v2821, %v2370
        %v2856 = vsel %vm2850, %v2823, %v2372
        %v2858 = vsel %vm2850, %v2825, %v2374
        %v2860 = vsel %vm2850, %v2827, %v2376
        %v2862 = vsel %vm2850, %v2829, %v2378
        %v2864 = vsel %vm2850, %v2831, %v2380
        %v2866 = vsel %vm2850, %v2833, %v2382
        %v2868 = vsel %vm2850, %v2835, %v2384
        %v2870 = vsel %vm2850, %v2837, %v2386
        %v2872 = vsel %vm2850, %v2839, %v2388
        %v2874 = vsel %vm2850, %v2841, %v2390
        %v2876 = vsel %vm2850, %v2843, %v2392
        %v2878 = vsel %vm2850, %v2845, %v2394
        %v2880 = vsel %vm2850, %v2847, %v2396
        %v2882 = vsel %vm2850, %v2849, %v2398
        %vm2883 = vcmask 162816
        %v2885 = vsel %vm2883, %v2852, %v2448
        %v2887 = vsel %vm2883, %v2854, %v2450
        %v2889 = vsel %vm2883, %v2856, %v2452
        %v2891 = vsel %vm2883, %v2858, %v2454
        %v2893 = vsel %vm2883, %v2860, %v2456
        %v2895 = vsel %vm2883, %v2862, %v2458
        %v2897 = vsel %vm2883, %v2864, %v2460
        %v2899 = vsel %vm2883, %v2866, %v2462
        %v2901 = vsel %vm2883, %v2868, %v2464
        %v2903 = vsel %vm2883, %v2870, %v2466
        %v2905 = vsel %vm2883, %v2872, %v2468
        %v2907 = vsel %vm2883, %v2874, %v2470
        %v2909 = vsel %vm2883, %v2876, %v2472
        %v2911 = vsel %vm2883, %v2878, %v2474
        %v2913 = vsel %vm2883, %v2880, %v2476
        %v2915 = vsel %vm2883, %v2882, %v2478
        %vm2916 = vcmask 195584
        %v2918 = vsel %vm2916, %v2885, %v2544
        %v2920 = vsel %vm2916, %v2887, %v2546
        %v2922 = vsel %vm2916, %v2889, %v2548
        %v2924 = vsel %vm2916, %v2891, %v2550
        %v2926 = vsel %vm2916, %v2893, %v2552
        %v2928 = vsel %vm2916, %v2895, %v2554
        %v2930 = vsel %vm2916, %v2897, %v2556
        %v2932 = vsel %vm2916, %v2899, %v2558
        %v2934 = vsel %vm2916, %v2901, %v2560
        %v2936 = vsel %vm2916, %v2903, %v2562
        %v2938 = vsel %vm2916, %v2905, %v2564
        %v2940 = vsel %vm2916, %v2907, %v2566
        %v2942 = vsel %vm2916, %v2909, %v2568
        %v2944 = vsel %vm2916, %v2911, %v2570
        %v2946 = vsel %vm2916, %v2913, %v2572
        %v2948 = vsel %vm2916, %v2915, %v2574
        %vm2949 = vcmask 228352
        %v2951 = vsel %vm2949, %v2918, %v2624
        %v2953 = vsel %vm2949, %v2920, %v2626
        %v2955 = vsel %vm2949, %v2922, %v2628
        %v2957 = vsel %vm2949, %v2924, %v2630
        %v2959 = vsel %vm2949, %v2926, %v2632
        %v2961 = vsel %vm2949, %v2928, %v2634
        %v2963 = vsel %vm2949, %v2930, %v2636
        %v2965 = vsel %vm2949, %v2932, %v2638
        %v2967 = vsel %vm2949, %v2934, %v2640
        %v2969 = vsel %vm2949, %v2936, %v2642
        %v2971 = vsel %vm2949, %v2938, %v2644
        %v2973 = vsel %vm2949, %v2940, %v2646
        %v2975 = vsel %vm2949, %v2942, %v2648
        %v2977 = vsel %vm2949, %v2944, %v2650
        %v2979 = vsel %vm2949, %v2946, %v2652
        %v2981 = vsel %vm2949, %v2948, %v2654
        %vm2982 = vcmask 261120
        %v2984 = vsel %vm2982, %v2951, %v2704
        %v2986 = vsel %vm2982, %v2953, %v2706
        %v2988 = vsel %vm2982, %v2955, %v2708
        %v2990 = vsel %vm2982, %v2957, %v2710
        %v2992 = vsel %vm2982, %v2959, %v2712
        %v2994 = vsel %vm2982, %v2961, %v2714
        %v2996 = vsel %vm2982, %v2963, %v2716
        %v2998 = vsel %vm2982, %v2965, %v2718
        %v3000 = vsel %vm2982, %v2967, %v2720
        %v3002 = vsel %vm2982, %v2969, %v2722
        %v3004 = vsel %vm2982, %v2971, %v2724
        %v3006 = vsel %vm2982, %v2973, %v2726
        %v3008 = vsel %vm2982, %v2975, %v2728
        %v3010 = vsel %vm2982, %v2977, %v2730
        %v3012 = vsel %vm2982, %v2979, %v2732
        %v3014 = vsel %vm2982, %v2981, %v2734
        %v3015 = vld [vmem:[%s1] sm:$0xf]
        %v3016 = vld [vmem:[%s1 + $0x4] sm:$0xf]
        %v3017 = vld [vmem:[%s1 + $0x8] sm:$0xf]
        %v3018 = vld [vmem:[%s1 + $0xc] sm:$0xf]
        %v3019 = vld [vmem:[%s1 + $0x10] sm:$0x3]
        %v3025 = vunpack.c.l.b16 %v3015
        %v3026 = vunpack.c.l.b16 %v3016
        %v3027 = vunpack.c.l.b16 %v3017
        %v3028 = vunpack.c.l.b16 %v3018
        %v3029 = vunpack.c.l.b16 %v3019
        %v3030 = vpack.c.b16 %v3026, %v3025
        %v3031 = vpack.c.b16 %v3028, %v3027
        %v3032 = vpack.c.b16 %v3029, %v3029
        %vm3035 = vcmask 293888
        %v3036 = vsel %vm3035, %v2984, 0
        %v3038 = vsel %vm3035, %v2986, 0
        %v3040 = vsel %vm3035, %v2988, 0
        %v3042 = vsel %vm3035, %v2990, 0
        %v3044 = vsel %vm3035, %v2992, 0
        %v3046 = vsel %vm3035, %v2994, 0
        %v3048 = vsel %vm3035, %v2996, 0
        %v3050 = vsel %vm3035, %v2998, 0
        %v3052 = vsel %vm3035, %v3000, 0
        %v3054 = vsel %vm3035, %v3002, 0
        %v3056 = vsel %vm3035, %v3004, 0
        %v3058 = vsel %vm3035, %v3006, 0
        %v3060 = vsel %vm3035, %v3008, 0
        %v3062 = vsel %vm3035, %v3010, 0
        %v3064 = vsel %vm3035, %v3012, 0
        %v3066 = vsel %vm3035, %v3014, 0
        %vm3068 = vcmask 1041408
        %v3070 = vsel %vm3068, %v3032, 0
        %3072 = vmatprep.subr.bf16.mxu0 0
        %3073 = vmatpush1.bf16.msra.mxu0 %v3030
        %3074 = vmatprep.subr.bf16.mxu0 0
        %3075 = vmatpush1.bf16.msra.mxu0 %v3031
        %3076 = vmatprep.subr.bf16.mxu0 0
        %3077 = vmatpush1.bf16.msra.mxu0 %v3070
        %3078 = vmatprep.subr.bf16.mxu0 0
        %3079 = vmatpush1.bf16.msra.mxu0 0
        %3080 = vmatprep.subr.bf16.mxu0 0
        %3081 = vmatpush1.bf16.msra.mxu0 0
        %3082 = vmatprep.subr.bf16.mxu0 0
        %3083 = vmatpush1.bf16.msra.mxu0 0
        %3084 = vmatprep.subr.bf16.mxu0 0
        %3085 = vmatpush1.bf16.msra.mxu0 0
        %3086 = vmatprep.subr.bf16.mxu0 0
        %3087 = vmatpush1.bf16.msra.mxu0 0
        %3088 = vmatprep.subr.bf16.mxu0 0
        %3089 = vmatpush1.bf16.msra.mxu0 0
        %3090 = vmatprep.subr.bf16.mxu0 0
        %3091 = vmatpush1.bf16.msra.mxu0 0
        %3092 = vmatprep.subr.bf16.mxu0 0
        %3093 = vmatpush1.bf16.msra.mxu0 0
        %3094 = vmatprep.subr.bf16.mxu0 0
        %3095 = vmatpush1.bf16.msra.mxu0 0
        %3096 = vmatprep.subr.bf16.mxu0 0
        %3097 = vmatpush1.bf16.msra.mxu0 0
        %3098 = vmatprep.subr.bf16.mxu0 0
        %3099 = vmatpush1.bf16.msra.mxu0 0
        %3100 = vmatprep.subr.bf16.mxu0 0
        %3101 = vmatpush1.bf16.msra.mxu0 0
        %3102 = vmatprep.subr.bf16.mxu0 0
        %3103 = vmatpush1.bf16.msra.mxu0 0
        %3104 = vmatprep.mubr.bf16.mxu0 0
        %3105 = vmatmul.mubr.bf16.gmra.mrb[0].mxu0 %v3036
        %v3106 = vpop.f32.mrb[0].mxu0
        %v3107 = vadd.f32 0.0, %v3106
        %v3108 = vpop.f32.mrb[0].mxu0
        %v3109 = vpop.f32.mrb[0].mxu0
        %v3110 = vadd.f32 0.0, %v3109
        %v3111 = vpop.f32.mrb[0].mxu0
        %3112 = vmatprep.mubr.bf16.mxu0 0
        %3113 = vmatmul.mubr.bf16.gmra.mrb[0].mxu0 %v3038
        %v3114 = vpop.f32.mrb[0].mxu0
        %v3115 = vadd.f32 0.0, %v3114
        %v3116 = vpop.f32.mrb[0].mxu0
        %v3117 = vpop.f32.mrb[0].mxu0
        %v3118 = vadd.f32 0.0, %v3117
        %v3119 = vpop.f32.mrb[0].mxu0
        %3120 = vmatprep.mubr.bf16.mxu0 0
        %3121 = vmatmul.mubr.bf16.gmra.mrb[0].mxu0 %v3040
        %v3122 = vpop.f32.mrb[0].mxu0
        %v3123 = vadd.f32 0.0, %v3122
        %v3124 = vpop.f32.mrb[0].mxu0
        %v3125 = vpop.f32.mrb[0].mxu0
        %v3126 = vadd.f32 0.0, %v3125
        %v3127 = vpop.f32.mrb[0].mxu0
        %3128 = vmatprep.mubr.bf16.mxu0 0
        %3129 = vmatmul.mubr.bf16.gmra.mrb[0].mxu0 %v3042
        %v3130 = vpop.f32.mrb[0].mxu0
        %v3131 = vadd.f32 0.0, %v3130
        %v3132 = vpop.f32.mrb[0].mxu0
        %v3133 = vpop.f32.mrb[0].mxu0
        %v3134 = vadd.f32 0.0, %v3133
        %v3135 = vpop.f32.mrb[0].mxu0
        %3136 = vmatprep.mubr.bf16.mxu0 0
        %3137 = vmatmul.mubr.bf16.gmra.mrb[0].mxu0 %v3044
        %v3138 = vpop.f32.mrb[0].mxu0
        %v3139 = vadd.f32 0.0, %v3138
        %v3140 = vpop.f32.mrb[0].mxu0
        %v3141 = vpop.f32.mrb[0].mxu0
        %v3142 = vadd.f32 0.0, %v3141
        %v3143 = vpop.f32.mrb[0].mxu0
        %3144 = vmatprep.mubr.bf16.mxu0 0
        %3145 = vmatmul.mubr.bf16.gmra.mrb[0].mxu0 %v3046
        %v3146 = vpop.f32.mrb[0].mxu0
        %v3147 = vadd.f32 0.0, %v3146
        %v3148 = vpop.f32.mrb[0].mxu0
        %v3149 = vpop.f32.mrb[0].mxu0
        %v3150 = vadd.f32 0.0, %v3149
        %v3151 = vpop.f32.mrb[0].mxu0
        %3152 = vmatprep.mubr.bf16.mxu0 0
        %3153 = vmatmul.mubr.bf16.gmra.mrb[0].mxu0 %v3048
        %v3154 = vpop.f32.mrb[0].mxu0
        %v3155 = vadd.f32 0.0, %v3154
        %v3156 = vpop.f32.mrb[0].mxu0
        %v3157 = vpop.f32.mrb[0].mxu0
        %v3158 = vadd.f32 0.0, %v3157
        %v3159 = vpop.f32.mrb[0].mxu0
        %3160 = vmatprep.mubr.bf16.mxu0 0
        %3161 = vmatmul.mubr.bf16.gmra.mrb[0].mxu0 %v3050
        %v3162 = vpop.f32.mrb[0].mxu0
        %v3163 = vadd.f32 0.0, %v3162
        %v3164 = vpop.f32.mrb[0].mxu0
        %v3165 = vpop.f32.mrb[0].mxu0
        %v3166 = vadd.f32 0.0, %v3165
        %v3167 = vpop.f32.mrb[0].mxu0
        %3168 = vmatprep.mubr.bf16.mxu0 0
        %3169 = vmatmul.mubr.bf16.gmra.mrb[0].mxu0 %v3052
        %v3170 = vpop.f32.mrb[0].mxu0
        %v3171 = vadd.f32 0.0, %v3170
        %v3172 = vpop.f32.mrb[0].mxu0
        %v3173 = vpop.f32.mrb[0].mxu0
        %v3174 = vadd.f32 0.0, %v3173
        %v3175 = vpop.f32.mrb[0].mxu0
        %3176 = vmatprep.mubr.bf16.mxu0 0
        %3177 = vmatmul.mubr.bf16.gmra.mrb[0].mxu0 %v3054
        %v3178 = vpop.f32.mrb[0].mxu0
        %v3179 = vadd.f32 0.0, %v3178
        %v3180 = vpop.f32.mrb[0].mxu0
        %v3181 = vpop.f32.mrb[0].mxu0
        %v3182 = vadd.f32 0.0, %v3181
        %v3183 = vpop.f32.mrb[0].mxu0
        %3184 = vmatprep.mubr.bf16.mxu0 0
        %3185 = vmatmul.mubr.bf16.gmra.mrb[0].mxu0 %v3056
        %v3186 = vpop.f32.mrb[0].mxu0
        %v3187 = vadd.f32 0.0, %v3186
        %v3188 = vpop.f32.mrb[0].mxu0
        %v3189 = vpop.f32.mrb[0].mxu0
        %v3190 = vadd.f32 0.0, %v3189
        %v3191 = vpop.f32.mrb[0].mxu0
        %3192 = vmatprep.mubr.bf16.mxu0 0
        %3193 = vmatmul.mubr.bf16.gmra.mrb[0].mxu0 %v3058
        %v3194 = vpop.f32.mrb[0].mxu0
        %v3195 = vadd.f32 0.0, %v3194
        %v3196 = vpop.f32.mrb[0].mxu0
        %v3197 = vpop.f32.mrb[0].mxu0
        %v3198 = vadd.f32 0.0, %v3197
        %v3199 = vpop.f32.mrb[0].mxu0
        %3200 = vmatprep.mubr.bf16.mxu0 0
        %3201 = vmatmul.mubr.bf16.gmra.mrb[0].mxu0 %v3060
        %v3202 = vpop.f32.mrb[0].mxu0
        %v3203 = vadd.f32 0.0, %v3202
        %v3204 = vpop.f32.mrb[0].mxu0
        %v3205 = vpop.f32.mrb[0].mxu0
        %v3206 = vadd.f32 0.0, %v3205
        %v3207 = vpop.f32.mrb[0].mxu0
        %3208 = vmatprep.mubr.bf16.mxu0 0
        %3209 = vmatmul.mubr.bf16.gmra.mrb[0].mxu0 %v3062
        %v3210 = vpop.f32.mrb[0].mxu0
        %v3211 = vadd.f32 0.0, %v3210
        %v3212 = vpop.f32.mrb[0].mxu0
        %v3213 = vpop.f32.mrb[0].mxu0
        %v3214 = vadd.f32 0.0, %v3213
        %v3215 = vpop.f32.mrb[0].mxu0
        %3216 = vmatprep.mubr.bf16.mxu0 0
        %3217 = vmatmul.mubr.bf16.gmra.mrb[0].mxu0 %v3064
        %v3218 = vpop.f32.mrb[0].mxu0
        %v3219 = vadd.f32 0.0, %v3218
        %v3220 = vpop.f32.mrb[0].mxu0
        %v3221 = vpop.f32.mrb[0].mxu0
        %v3222 = vadd.f32 0.0, %v3221
        %v3223 = vpop.f32.mrb[0].mxu0
        %3224 = vmatprep.mubr.bf16.mxu0 0
        %3225 = vmatmul.mubr.bf16.gmra.mrb[0].mxu0 %v3066
        %v3226 = vpop.f32.mrb[0].mxu0
        %v3227 = vadd.f32 0.0, %v3226
        %v3228 = vpop.f32.mrb[0].mxu0
        %v3229 = vpop.f32.mrb[0].mxu0
        %v3230 = vadd.f32 0.0, %v3229
        %v3231 = vpop.f32.mrb[0].mxu0
        %3232 = vdwg.mxu0
        %v3233 = vsel %vm2784, %v3107, 0.0
        %v3234 = vsel %vm2784, %v3110, 0.0
        %v3235 = vadd.f32 %v3233, %v3234
        %v3236 = vsel %vm2784, %v3115, 0.0
        %v3237 = vadd.f32 %v3235, %v3236
        %v3238 = vsel %vm2784, %v3118, 0.0
        %v3239 = vadd.f32 %v3237, %v3238
        %v3240 = vsel %vm2784, %v3123, 0.0
        %v3241 = vadd.f32 %v3239, %v3240
        %v3242 = vsel %vm2784, %v3126, 0.0
        %v3243 = vadd.f32 %v3241, %v3242
        %v3244 = vsel %vm2784, %v3131, 0.0
        %v3245 = vadd.f32 %v3243, %v3244
        %v3246 = vsel %vm2784, %v3134, 0.0
        %v3247 = vadd.f32 %v3245, %v3246
        %v3248 = vsel %vm2784, %v3139, 0.0
        %v3249 = vadd.f32 %v3247, %v3248
        %v3250 = vsel %vm2784, %v3142, 0.0
        %v3251 = vadd.f32 %v3249, %v3250
        %v3252 = vsel %vm2784, %v3147, 0.0
        %v3253 = vadd.f32 %v3251, %v3252
        %v3254 = vsel %vm2784, %v3150, 0.0
        %v3255 = vadd.f32 %v3253, %v3254
        %v3256 = vsel %vm2784, %v3155, 0.0
        %v3257 = vadd.f32 %v3255, %v3256
        %v3258 = vsel %vm2784, %v3158, 0.0
        %v3259 = vadd.f32 %v3257, %v3258
        %v3260 = vsel %vm2784, %v3163, 0.0
        %v3261 = vadd.f32 %v3259, %v3260
        %v3262 = vsel %vm2784, %v3166, 0.0
        %v3263 = vadd.f32 %v3261, %v3262
        %v3264 = vsel %vm2784, %v3171, 0.0
        %v3265 = vadd.f32 %v3263, %v3264
        %v3266 = vsel %vm2784, %v3174, 0.0
        %v3267 = vadd.f32 %v3265, %v3266
        %v3268 = vsel %vm2784, %v3179, 0.0
        %v3269 = vadd.f32 %v3267, %v3268
        %v3270 = vsel %vm2784, %v3182, 0.0
        %v3271 = vadd.f32 %v3269, %v3270
        %v3272 = vsel %vm2784, %v3187, 0.0
        %v3273 = vadd.f32 %v3271, %v3272
        %v3274 = vsel %vm2784, %v3190, 0.0
        %v3275 = vadd.f32 %v3273, %v3274
        %v3276 = vsel %vm2784, %v3195, 0.0
        %v3277 = vadd.f32 %v3275, %v3276
        %v3278 = vsel %vm2784, %v3198, 0.0
        %v3279 = vadd.f32 %v3277, %v3278
        %v3280 = vsel %vm2784, %v3203, 0.0
        %v3281 = vadd.f32 %v3279, %v3280
        %v3282 = vsel %vm2784, %v3206, 0.0
        %v3283 = vadd.f32 %v3281, %v3282
        %v3284 = vsel %vm2784, %v3211, 0.0
        %v3285 = vadd.f32 %v3283, %v3284
        %v3286 = vsel %vm2784, %v3214, 0.0
        %v3287 = vadd.f32 %v3285, %v3286
        %v3288 = vsel %vm2784, %v3219, 0.0
        %v3289 = vadd.f32 %v3287, %v3288
        %v3290 = vsel %vm2784, %v3222, 0.0
        %v3291 = vadd.f32 %v3289, %v3290
        %v3292 = vsel %vm2784, %v3227, 0.0
        %v3293 = vadd.f32 %v3291, %v3292
        %v3294 = vsel %vm2784, %v3230, 0.0
        %v3295 = vadd.f32 %v3293, %v3294
        %v3296 = vrot.slane %v3295, 4
        %v3297 = vadd.f32 %v3295, %v3296
        %v3298 = vrot.slane %v3297, 2
        %v3299 = vadd.f32 %v3297, %v3298
        %v3300 = vrot.slane %v3299, 1
        %v3301 = vadd.f32 %v3299, %v3300
        %v3302 = vmul.f32 %v3107, %v3107
        %v3303 = vmul.f32 %v3110, %v3110
        %v3304 = vmul.f32 %v3115, %v3115
        %v3305 = vmul.f32 %v3118, %v3118
        %v3306 = vmul.f32 %v3123, %v3123
        %v3307 = vmul.f32 %v3126, %v3126
        %v3308 = vmul.f32 %v3131, %v3131
        %v3309 = vmul.f32 %v3134, %v3134
        %v3310 = vmul.f32 %v3139, %v3139
        %v3311 = vmul.f32 %v3142, %v3142
        %v3312 = vmul.f32 %v3147, %v3147
        %v3313 = vmul.f32 %v3150, %v3150
        %v3314 = vmul.f32 %v3155, %v3155
        %v3315 = vmul.f32 %v3158, %v3158
        %v3316 = vmul.f32 %v3163, %v3163
        %v3317 = vmul.f32 %v3166, %v3166
        %v3318 = vmul.f32 %v3171, %v3171
        %v3319 = vmul.f32 %v3174, %v3174
        %v3320 = vmul.f32 %v3179, %v3179
        %v3321 = vmul.f32 %v3182, %v3182
        %v3322 = vmul.f32 %v3187, %v3187
        %v3323 = vmul.f32 %v3190, %v3190
        %v3324 = vmul.f32 %v3195, %v3195
        %v3325 = vmul.f32 %v3198, %v3198
        %v3326 = vmul.f32 %v3203, %v3203
        %v3327 = vmul.f32 %v3206, %v3206
        %v3328 = vmul.f32 %v3211, %v3211
        %v3329 = vmul.f32 %v3214, %v3214
        %v3330 = vmul.f32 %v3219, %v3219
        %v3331 = vmul.f32 %v3222, %v3222
        %v3332 = vmul.f32 %v3227, %v3227
        %v3333 = vmul.f32 %v3230, %v3230
        %v3334 = vsel %vm2784, %v3302, 0.0
        %v3335 = vsel %vm2784, %v3303, 0.0
        %v3336 = vadd.f32 %v3334, %v3335
        %v3337 = vsel %vm2784, %v3304, 0.0
        %v3338 = vadd.f32 %v3336, %v3337
        %v3339 = vsel %vm2784, %v3305, 0.0
        %v3340 = vadd.f32 %v3338, %v3339
        %v3341 = vsel %vm2784, %v3306, 0.0
        %v3342 = vadd.f32 %v3340, %v3341
        %v3343 = vsel %vm2784, %v3307, 0.0
        %v3344 = vadd.f32 %v3342, %v3343
        %v3345 = vsel %vm2784, %v3308, 0.0
        %v3346 = vadd.f32 %v3344, %v3345
        %v3347 = vsel %vm2784, %v3309, 0.0
        %v3348 = vadd.f32 %v3346, %v3347
        %v3349 = vsel %vm2784, %v3310, 0.0
        %v3350 = vadd.f32 %v3348, %v3349
        %v3351 = vsel %vm2784, %v3311, 0.0
        %v3352 = vadd.f32 %v3350, %v3351
        %v3353 = vsel %vm2784, %v3312, 0.0
        %v3354 = vadd.f32 %v3352, %v3353
        %v3355 = vsel %vm2784, %v3313, 0.0
        %v3356 = vadd.f32 %v3354, %v3355
        %v3357 = vsel %vm2784, %v3314, 0.0
        %v3358 = vadd.f32 %v3356, %v3357
        %v3359 = vsel %vm2784, %v3315, 0.0
        %v3360 = vadd.f32 %v3358, %v3359
        %v3361 = vsel %vm2784, %v3316, 0.0
        %v3362 = vadd.f32 %v3360, %v3361
        %v3363 = vsel %vm2784, %v3317, 0.0
        %v3364 = vadd.f32 %v3362, %v3363
        %v3365 = vsel %vm2784, %v3318, 0.0
        %v3366 = vadd.f32 %v3364, %v3365
        %v3367 = vsel %vm2784, %v3319, 0.0
        %v3368 = vadd.f32 %v3366, %v3367
        %v3369 = vsel %vm2784, %v3320, 0.0
        %v3370 = vadd.f32 %v3368, %v3369
        %v3371 = vsel %vm2784, %v3321, 0.0
        %v3372 = vadd.f32 %v3370, %v3371
        %v3373 = vsel %vm2784, %v3322, 0.0
        %v3374 = vadd.f32 %v3372, %v3373
        %v3375 = vsel %vm2784, %v3323, 0.0
        %v3376 = vadd.f32 %v3374, %v3375
        %v3377 = vsel %vm2784, %v3324, 0.0
        %v3378 = vadd.f32 %v3376, %v3377
        %v3379 = vsel %vm2784, %v3325, 0.0
        %v3380 = vadd.f32 %v3378, %v3379
        %v3381 = vsel %vm2784, %v3326, 0.0
        %v3382 = vadd.f32 %v3380, %v3381
        %v3383 = vsel %vm2784, %v3327, 0.0
        %v3384 = vadd.f32 %v3382, %v3383
        %v3385 = vsel %vm2784, %v3328, 0.0
        %v3386 = vadd.f32 %v3384, %v3385
        %v3387 = vsel %vm2784, %v3329, 0.0
        %v3388 = vadd.f32 %v3386, %v3387
        %v3389 = vsel %vm2784, %v3330, 0.0
        %v3390 = vadd.f32 %v3388, %v3389
        %v3391 = vsel %vm2784, %v3331, 0.0
        %v3392 = vadd.f32 %v3390, %v3391
        %v3393 = vsel %vm2784, %v3332, 0.0
        %v3394 = vadd.f32 %v3392, %v3393
        %v3395 = vsel %vm2784, %v3333, 0.0
        %v3396 = vadd.f32 %v3394, %v3395
        %v3397 = vrot.slane %v3396, 4
        %v3398 = vadd.f32 %v3396, %v3397
        %v3399 = vrot.slane %v3398, 2
        %v3400 = vadd.f32 %v3398, %v3399
        %v3401 = vrot.slane %v3400, 1
        %v3402 = vadd.f32 %v3400, %v3401
        %vm3403 = vcmask 1040384
        %v3404 = vsel %vm3403, %v3301, %v3402
        %vm3405 = vcmask 58368
        %3406 = vst.msk [vmem:[%s150] sm:$0x3] %vm3405, %v3404
        %s3407 = sand.u32 %s85, 1
        %s3408 = scalar_lea.sflag [#allocation3], %s3407
        %s3409 = sand.u32 %s85, 1
        %s3410 = smul.addr %s3409, 2
        %s3411 = scalar_lea.vmem [#allocation2], %s3410
        // Predicated region
        $region29: #{tpu_custom_call.1} parent=27 // pred_check
          %p3412 = pneg %p95
        $region30: #{tpu_custom_call.1} parent=27 // pred_check_branch
          %3414 = sbr.rel (%p3412) target = $region32
        $region31: #{tpu_custom_call.1} parent=27 // pred_region
          %s3416 = ssub.s32 32, 32
          %3417 = vsyncadd %s3408, %s3416
          %s3418 = sadd.s32 %s21, %s20
          %s3419 = smul.addr %s3418, 32
          %s3420 = scalar_lea.hbm %s2, %s3419
          %s3422 = sshll.u32 %s3411, 4
          %s3423 = int_to_ptr.vmem [resolvable:$true] %s3422
          %3425 = dma.vmem_to_hbm [thread:$0]  %s3423, 32, %s3420, %s3408
        $region32: #{tpu_custom_call.1} parent=27 // pred_fallthru
          _
      $region28: #{tpu_custom_call.1} parent=5 // pred_fallthru
        _
      %p3426 = scmp.le.s32.totalorder 2, %s11
      // Predicated region
      $region33: #{tpu_custom_call.1} parent=5 // pred_check
        %p3427 = pneg %p3426
      $region34: #{tpu_custom_call.1} parent=5 // pred_check_branch
        %3429 = sbr.rel (%p3427) target = $region36
      $region35: #{tpu_custom_call.1} parent=5 // pred_region
        %s3430 = ssub.s32 %s11, 2
        // Predicated region
        $region37: #{tpu_custom_call.1} parent=35 // pred_check
          %p3431 = pneg %p101
        $region38: #{tpu_custom_call.1} parent=35 // pred_check_branch
          %3433 = sbr.rel (%p3431) target = $region40
        $region39: #{tpu_custom_call.1} parent=35 // pred_region
          %s3434 = sand.u32 %s86, 1
          %s3435 = scalar_lea.sflag [#allocation3], %s3434
          %s3436 = sand.u32 %s86, 1
          %s3437 = smul.addr %s3436, 2
          %s3438 = scalar_lea.vmem [#allocation2], %s3437
          %3439 = dma.done %s3435, 32
        $region40: #{tpu_custom_call.1} parent=35 // pred_fallthru
          _
      $region36: #{tpu_custom_call.1} parent=5 // pred_fallthru
        _
    $region6: #{tpu_custom_call.1} parent=1 // loop_footer
      %s15 = sadd.s32 1, %s11
    $region7: #{tpu_custom_call.1} parent=1 // loop_footer_branch
      %10 = sbr.rel target = $region3
    $region8: #{tpu_custom_call.1} parent=1 // loop_exit
      _
    %3440 = vsyncpa [#allocation3], 1
    %s3441 = scalar_lea.sflag [#allocation3], 1
    %3442 = vsyncpa %s3441, 1

</llo_original>
